<compile_context>
chip_gen: v7x
topology: tpu7x:2x2x1
jax: 0.10.0
libtpu: 0.0.40
codegen_flags: <defaults>
</compile_context>

<pallas_src>
import math

import jax
import jax.numpy as jnp
import numpy as np
from jax import lax
from jax.experimental import pallas as pl
from jax.experimental.pallas import tpu as pltpu

DIM = 32                    # config.model.size
N_HEAD = 2
HIDS = [13, 768, 2]
IN_DIM = HIDS[0] + 2        # 15 (demand | pp)
QROWS = IN_DIM + 1          # 16 (folded weights + bias row)
OUT_DIM = HIDS[0] + 1       # 14
OUT_PAD = 128               # lane-dense output / m3 padding

# ---- slab row offsets (all weight blocks start on 8-row boundaries) ---------
R_BBIG, R_BM1, R_BM2, R_BM3 = 0, 1, 2, 3
R_QMAT = 8
R_WM1 = R_QMAT + QROWS          # 24
R_WM2 = R_WM1 + DIM             # 56
R_WM3 = R_WM2 + DIM             # 88
SLAB_ROWS = R_WM3 + DIM // 2    # 104


# ------------------------------ fused kernel -------------------------------- #

def _fused_kernel(x_ref, attr_ref, mask_ref, wbig_ref, slab_ref, acst_ref, o_ref):
    f32 = jnp.float32
    B = x_ref.shape[0]
    M = attr_ref.shape[0]
    N = M // B                  # row-major (B, N) flattening -- matches wrapper

    # ---- [c | K | V] from ONE wide K=768 MXU pass (l2 and k/v folded on host).
    b_big = slab_ref[pl.ds(R_BBIG, 1), pl.ds(0, 3 * DIM)]                  # [1, 96]
    big = jnp.dot(attr_ref[...], wbig_ref[...], preferred_element_type=f32) + b_big
    c = big[:, 0:DIM]                       # l2(attr)                      [M, 32]
    kv = big[:, DIM:3 * DIM]                # [K | V]                       [M, 64]

    # ---- Q for the B distinct demand rows (l1, q-proj, biases, 1/sqrt(df) all
    # folded into one [16, 32] matrix; the ones column of x_aug carries the bias).
    qmat = slab_ref[pl.ds(R_QMAT, QROWS), pl.ds(0, DIM)]                    # [16, 32]
    q = jnp.dot(x_ref[...], qmat, preferred_element_type=f32)               # [B, 32]

    # ---- Lane-dense per-feature cross attention, flat (j, f) lane layout.
    # Scatter K / V onto a block-diagonal [M*DIM, DIM] pattern with one MXU
    # matmul + one mask multiply (no reshapes / transposes needed):
    jt = acst_ref[:, pl.ds(0, M)]                                           # [M*32, M]
    fmask = acst_ref[:, pl.ds(M, 2 * DIM)]                                  # [M*32, 64]
    rkv = jnp.dot(jt, kv, preferred_element_type=f32) * fmask               # [M*32, 64]
    rk = rkv[:, 0:DIM]                      # rk[(j,f), t] = [t==f] * K[j,f]
    rv = rkv[:, DIM:2 * DIM]                # rv[(j,f), t] = [t==f] * V[j,f]
    ssum = fmask[:, 0:DIM]                  # block-summation matrix [t==f]

    # logits[b, (j,f)] = Q[b,f]*K[j,f]/sqrt(df)  (single-term rows -> exact)
    logits = lax.dot_general(q, rk, (((1,), (1,)), ((), ())),
                             preferred_element_type=f32)                    # [B, M*32]
    logits = jnp.clip(logits, -60.0, 60.0)  # stability guard (replaces max-sub)
    p = jnp.exp(logits)                     # [2, 512]: 100% lane occupancy
    num = jnp.dot(p, rv, preferred_element_type=f32)                        # [B, 32]
    den = jnp.dot(p, ssum, preferred_element_type=f32)                      # [B, 32]
    r = pl.reciprocal(den, approx=True)     # EUP slot
    r = r * (2.0 - den * r)                 # one Newton-Raphson refinement
    wv = num * r                            # softmax-weighted V per batch row

    # Expand over the N nodes of each batch row (sublane broadcast + concat);
    # exact because the attention output depends only on the batch row.
    wv = jnp.concatenate(
        [jnp.broadcast_to(wv[b:b + 1, :], (N, DIM)) for b in range(B)], axis=0)
    a = wv * c                              # attention(x, c) * l2(attr)    [M, 32]

    # ---- MLP (weights from the packed slab) + node mask applied twice.
    bm1 = slab_ref[pl.ds(R_BM1, 1), pl.ds(0, DIM)]
    bm2 = slab_ref[pl.ds(R_BM2, 1), pl.ds(0, DIM // 2)]
    bm3 = slab_ref[pl.ds(R_BM3, 1), pl.ds(0, OUT_PAD)]
    wm1 = slab_ref[pl.ds(R_WM1, DIM), pl.ds(0, DIM)]
    wm2 = slab_ref[pl.ds(R_WM2, DIM), pl.ds(0, DIM // 2)]
    wm3 = slab_ref[pl.ds(R_WM3, DIM // 2), pl.ds(0, OUT_PAD)]
    h = jnp.maximum(jnp.dot(a, wm1, preferred_element_type=f32) + bm1, 0.0)
    h = jnp.maximum(jnp.dot(h, wm2, preferred_element_type=f32) + bm2, 0.0)
    out = jnp.dot(h, wm3, preferred_element_type=f32) + bm3                 # [M, 128]
    m = mask_ref[...]                                                       # [M, 1]
    # mask applied twice, exactly as in the torch forward (m*m, not m)
    o_ref[...] = (out * (m * m)).astype(o_ref.dtype)


# ------------------------------ parameters ---------------------------------- #

def init_params(key):
    """Deterministic PyTorch-style (uniform +-1/sqrt(fan_in)) initialization."""
    def lin(k, fan_in, fan_out):
        k1, k2 = jax.random.split(k)
        bound = 1.0 / math.sqrt(fan_in)
        w = jax.random.uniform(k1, (fan_in, fan_out), jnp.float32, -bound, bound)
        b = jax.random.uniform(k2, (fan_out,), jnp.float32, -bound, bound)
        return w, b

    keys = jax.random.split(key, 8)
    return {
        "l1": lin(keys[0], IN_DIM, DIM),
        "l2": lin(keys[1], HIDS[1], DIM),
        "q":  lin(keys[2], DIM, DIM),
        "k":  lin(keys[3], DIM, DIM),
        "v":  lin(keys[4], DIM, DIM),
        "m1": lin(keys[5], DIM, DIM),
        "m2": lin(keys[6], DIM, DIM // 2),
        "m3": lin(keys[7], DIM // 2, OUT_DIM),
    }


def prepare_fused(params, batch, nodes):
    """Host-side weight folding / packing (free: static weight preprocessing)."""
    M = batch * nodes
    scale = 1.0 / math.sqrt(DIM // N_HEAD)
    w1, b1 = params["l1"]
    w2, b2 = params["l2"]
    wq, bq = params["q"]
    wk, bk = params["k"]
    wv, bv = params["v"]
    wm1, bm1 = params["m1"]
    wm2, bm2 = params["m2"]
    wm3, bm3 = params["m3"]

    # (1) fold l2 into the K/V projections -> one K=768 matmul, 96 output cols
    w_big = jnp.concatenate([w2, w2 @ wk, w2 @ wv], axis=1)                 # [768, 96]
    b_big = jnp.concatenate([b2, b2 @ wk + bk, b2 @ wv + bv])               # [96]

    # (2) fold l1 into the Q projection plus the 1/sqrt(df) scale; the bias is
    #     the last row (the wrapper appends a ones column to x)
    qmat = jnp.concatenate([(w1 @ wq) * scale,
                            ((b1 @ wq + bq) * scale)[None, :]], axis=0)     # [16, 32]

    # (3) small-weights slab (one DMA instead of ~14), 8-row-aligned blocks,
    #     128 lanes wide; m3 zero-padded to 128 cols for a lane-dense store
    slab = jnp.zeros((SLAB_ROWS, OUT_PAD), jnp.float32)
    slab = slab.at[R_BBIG, :3 * DIM].set(b_big)
    slab = slab.at[R_BM1, :DIM].set(bm1)
    slab = slab.at[R_BM2, :DIM // 2].set(bm2)
    slab = slab.at[R_BM3, :OUT_DIM].set(bm3)
    slab = slab.at[R_QMAT:R_QMAT + QROWS, :DIM].set(qmat)
    slab = slab.at[R_WM1:R_WM1 + DIM, :DIM].set(wm1)
    slab = slab.at[R_WM2:R_WM2 + DIM, :DIM // 2].set(wm2)
    slab = slab.at[R_WM3:R_WM3 + DIM // 2, :OUT_DIM].set(wm3)

    # (4) attention scatter / summation constants for the lane-dense softmax:
    #     Jt[(j,f), j'] = [j == j'],  ssum[(j,f), t] = [t == f]
    jt = jnp.repeat(jnp.eye(M, dtype=jnp.float32), DIM, axis=0)             # [M*32, M]
    ssum = jnp.tile(jnp.eye(DIM, dtype=jnp.float32), (M, 1))                # [M*32, 32]
    acst = jnp.concatenate([jt, ssum, ssum], axis=1)                        # [M*32, M+64]

    return {"w_big": w_big, "slab": slab, "acst": acst}


# -------------------------------- forward ------------------------------------ #

@jax.jit
def condition_network_forward(fused, demand, attr, pp, node_mask):
    B, N, A = attr.shape
    M = B * N
    # [demand | pp | 1]: the ones column carries the folded Q-path bias
    x_aug = jnp.concatenate([demand, pp, jnp.ones((B, 1), demand.dtype)], axis=1)
    attr_flat = attr.reshape(M, A)                                  # [M, 768]
    mask = node_mask.reshape(M, 1).astype(jnp.float32)              # [M, 1]

    vmem = pl.BlockSpec(memory_space=pltpu.MemorySpace.VMEM)
    # TODO(synk): if this forward is invoked for many graphs per step, add a
    # leading grid axis over graphs with dimension_semantics=("parallel",) to
    # use both v7x TensorCores and amortize the per-call overhead.
    out = pl.pallas_call(
        _fused_kernel,
        out_shape=jax.ShapeDtypeStruct((M, OUT_PAD), jnp.float32),  # lane-dense store
        in_specs=[vmem] * 6,
        out_specs=vmem,
    )(x_aug, attr_flat, mask, fused["w_big"], fused["slab"], fused["acst"])
    return out[:, :OUT_DIM].reshape(B, N, OUT_DIM)


# ----------------------------- pure-JAX reference ----------------------------- #

def reference_forward(params, demand, attr, pp, node_mask):
    def lin(x, wb, relu=False):
        y = x @ wb[0] + wb[1]
        return jnp.maximum(y, 0.0) if relu else y

    B, N, A = attr.shape
    x = jnp.concatenate([demand, pp], axis=1)
    d = lin(x, params["l1"])
    d3 = jnp.broadcast_to(d[:, None, :], (B, N, DIM)).reshape(B * N, DIM)
    c = lin(attr.reshape(B * N, A), params["l2"])
    Q, K, V = lin(d3, params["q"]), lin(c, params["k"]), lin(c, params["v"])
    df = DIM // N_HEAD
    Y = Q[:, None, :] * K[None, :, :] / math.sqrt(df)
    attn = jax.nn.softmax(Y, axis=1)
    wv = (attn * V[None, :, :]).sum(axis=1)
    a = wv * c
    h = lin(a, params["m1"], relu=True)
    h = lin(h, params["m2"], relu=True)
    o = lin(h, params["m3"])
    m = node_mask.reshape(B * N, 1).astype(jnp.float32)
    return (o * m * m).reshape(B, N, OUT_DIM)


# ---------------------------------- main -------------------------------------- #

if __name__ == "__main__":
    key = jax.random.PRNGKey(0)
    kp, kd, ka, kpp, km = jax.random.split(key, 5)
    params = init_params(kp)

    B, N = 2, 8
    fused = prepare_fused(params, B, N)

    demand = jax.random.normal(kd, (B, HIDS[0]), jnp.float32)                 # [2, 13]
    attr = jax.random.normal(ka, (B, N, HIDS[1]), jnp.float32)                # [2, 8, 768]
    pp = jax.random.normal(kpp, (B, HIDS[2]), jnp.float32)                    # [2, 2]
    node_mask = (jax.random.uniform(km, (B, N)) > 0.3).astype(jnp.float32)    # [2, 8]

    out = condition_network_forward(fused, demand, attr, pp, node_mask)
    out = jax.block_until_ready(out)
    assert out.shape == (B, N, OUT_DIM)

    ref = reference_forward(params, demand, attr, pp, node_mask)
    np.testing.assert_allclose(np.asarray(out), np.asarray(ref), rtol=1e-4, atol=1e-4)

    print("KERNEL_OK")
</pallas_src>

<mosaic_0001>
module attributes {stable_mosaic.version = 11 : i64} {
  func.func @_fused_kernel(%arg0: memref<2x16xf32, #tpu.memory_space<vmem>>, %arg1: memref<16x768xf32, #tpu.memory_space<vmem>>, %arg2: memref<16x1xf32, #tpu.memory_space<vmem>>, %arg3: memref<768x96xf32, #tpu.memory_space<vmem>>, %arg4: memref<104x128xf32, #tpu.memory_space<vmem>>, %arg5: memref<512x80xf32, #tpu.memory_space<vmem>>, %arg6: memref<16x128xf32, #tpu.memory_space<vmem>>) attributes {dimension_semantics = [], scalar_prefetch = 0 : i64, scratch_operands = 0 : i64, tpu.core_type = #tpu.core_type<tc>} {
    %c0 = arith.constant 0 : index
    %c0_0 = arith.constant 0 : index
    %0 = vector.load %arg4[%c0, %c0_0] : memref<104x128xf32, #tpu.memory_space<vmem>>, vector<1x96xf32>
    %c0_1 = arith.constant 0 : index
    %c0_2 = arith.constant 0 : index
    %1 = vector.load %arg1[%c0_1, %c0_2] : memref<16x768xf32, #tpu.memory_space<vmem>>, vector<16x768xf32>
    %c0_3 = arith.constant 0 : index
    %c0_4 = arith.constant 0 : index
    %2 = vector.load %arg3[%c0_3, %c0_4] : memref<768x96xf32, #tpu.memory_space<vmem>>, vector<768x96xf32>
    %cst = arith.constant dense<0.000000e+00> : vector<16x96xf32>
    %3 = tpu.matmul %1, %2, %cst {dimension_numbers = #tpu.dot_dimension_numbers<[1], [0], [0], [1], [0, 0, 1, 1], [], []>} : vector<16x768xf32>, vector<768x96xf32>, vector<16x96xf32> -> vector<16x96xf32>
    %4 = vector.broadcast %0 : vector<1x96xf32> to vector<16x96xf32>
    %5 = arith.addf %3, %4 : vector<16x96xf32>
    %6 = vector.extract_strided_slice %5 {offsets = [0, 0], sizes = [16, 32], strides = [1, 1]} : vector<16x96xf32> to vector<16x32xf32>
    %7 = vector.extract_strided_slice %5 {offsets = [0, 32], sizes = [16, 64], strides = [1, 1]} : vector<16x96xf32> to vector<16x64xf32>
    %c8 = arith.constant 8 : index
    %c0_5 = arith.constant 0 : index
    %8 = vector.load %arg4[%c8, %c0_5] : memref<104x128xf32, #tpu.memory_space<vmem>>, vector<16x32xf32>
    %c0_6 = arith.constant 0 : index
    %c0_7 = arith.constant 0 : index
    %9 = vector.load %arg0[%c0_6, %c0_7] : memref<2x16xf32, #tpu.memory_space<vmem>>, vector<2x16xf32>
    %cst_8 = arith.constant dense<0.000000e+00> : vector<2x32xf32>
    %10 = tpu.matmul %9, %8, %cst_8 {dimension_numbers = #tpu.dot_dimension_numbers<[1], [0], [0], [1], [0, 0, 1, 1], [], []>} : vector<2x16xf32>, vector<16x32xf32>, vector<2x32xf32> -> vector<2x32xf32>
    %c0_9 = arith.constant 0 : index
    %c0_10 = arith.constant 0 : index
    %11 = vector.load %arg5[%c0_9, %c0_10] : memref<512x80xf32, #tpu.memory_space<vmem>>, vector<512x16xf32>
    %c0_11 = arith.constant 0 : index
    %c16 = arith.constant 16 : index
    %12 = vector.load %arg5[%c0_11, %c16] : memref<512x80xf32, #tpu.memory_space<vmem>>, vector<512x64xf32>
    %cst_12 = arith.constant dense<0.000000e+00> : vector<512x64xf32>
    %13 = tpu.matmul %11, %7, %cst_12 {dimension_numbers = #tpu.dot_dimension_numbers<[1], [0], [0], [1], [0, 0, 1, 1], [], []>} : vector<512x16xf32>, vector<16x64xf32>, vector<512x64xf32> -> vector<512x64xf32>
    %14 = arith.mulf %13, %12 : vector<512x64xf32>
    %15 = vector.extract_strided_slice %14 {offsets = [0, 0], sizes = [512, 32], strides = [1, 1]} : vector<512x64xf32> to vector<512x32xf32>
    %16 = vector.extract_strided_slice %14 {offsets = [0, 32], sizes = [512, 32], strides = [1, 1]} : vector<512x64xf32> to vector<512x32xf32>
    %17 = vector.extract_strided_slice %12 {offsets = [0, 0], sizes = [512, 32], strides = [1, 1]} : vector<512x64xf32> to vector<512x32xf32>
    %cst_13 = arith.constant dense<0.000000e+00> : vector<2x512xf32>
    %18 = tpu.matmul %10, %15, %cst_13 {dimension_numbers = #tpu.dot_dimension_numbers<[1], [1], [0], [0], [0, 0, 1, 0], [], []>} : vector<2x32xf32>, vector<512x32xf32>, vector<2x512xf32> -> vector<2x512xf32>
    %cst_14 = arith.constant -6.000000e+01 : f32
    %cst_15 = arith.constant 6.000000e+01 : f32
    %19 = vector.broadcast %cst_14 : f32 to vector<2x512xf32>
    %20 = arith.maximumf %19, %18 : vector<2x512xf32>
    %21 = vector.broadcast %cst_15 : f32 to vector<2x512xf32>
    %22 = arith.minimumf %21, %20 : vector<2x512xf32>
    %23 = math.exp %22 : vector<2x512xf32>
    %cst_16 = arith.constant dense<0.000000e+00> : vector<2x32xf32>
    %24 = tpu.matmul %23, %16, %cst_16 {dimension_numbers = #tpu.dot_dimension_numbers<[1], [0], [0], [1], [0, 0, 1, 1], [], []>} : vector<2x512xf32>, vector<512x32xf32>, vector<2x32xf32> -> vector<2x32xf32>
    %cst_17 = arith.constant dense<0.000000e+00> : vector<2x32xf32>
    %25 = tpu.matmul %23, %17, %cst_17 {dimension_numbers = #tpu.dot_dimension_numbers<[1], [0], [0], [1], [0, 0, 1, 1], [], []>} : vector<2x512xf32>, vector<512x32xf32>, vector<2x32xf32> -> vector<2x32xf32>
    %26 = tpu.reciprocal %25 {approx = true} : vector<2x32xf32> -> vector<2x32xf32>
    %27 = arith.mulf %25, %26 : vector<2x32xf32>
    %cst_18 = arith.constant 2.000000e+00 : f32
    %28 = vector.broadcast %cst_18 : f32 to vector<2x32xf32>
    %29 = arith.subf %28, %27 : vector<2x32xf32>
    %30 = arith.mulf %26, %29 : vector<2x32xf32>
    %31 = arith.mulf %24, %30 : vector<2x32xf32>
    %32 = vector.extract_strided_slice %31 {offsets = [0, 0], sizes = [1, 32], strides = [1, 1]} : vector<2x32xf32> to vector<1x32xf32>
    %33 = vector.shape_cast %32 : vector<1x32xf32> to vector<1x32xf32>
    %34 = vector.broadcast %33 : vector<1x32xf32> to vector<8x32xf32>
    %35 = vector.extract_strided_slice %31 {offsets = [1, 0], sizes = [1, 32], strides = [1, 1]} : vector<2x32xf32> to vector<1x32xf32>
    %36 = vector.shape_cast %35 : vector<1x32xf32> to vector<1x32xf32>
    %37 = vector.broadcast %36 : vector<1x32xf32> to vector<8x32xf32>
    %38 = tpu.concatenate %34, %37 in 0 : vector<8x32xf32>, vector<8x32xf32> -> vector<16x32xf32>
    %39 = arith.mulf %38, %6 : vector<16x32xf32>
    %c1 = arith.constant 1 : index
    %c0_19 = arith.constant 0 : index
    %40 = vector.load %arg4[%c1, %c0_19] : memref<104x128xf32, #tpu.memory_space<vmem>>, vector<1x32xf32>
    %c2 = arith.constant 2 : index
    %c0_20 = arith.constant 0 : index
    %41 = vector.load %arg4[%c2, %c0_20] : memref<104x128xf32, #tpu.memory_space<vmem>>, vector<1x16xf32>
    %c3 = arith.constant 3 : index
    %c0_21 = arith.constant 0 : index
    %42 = vector.load %arg4[%c3, %c0_21] : memref<104x128xf32, #tpu.memory_space<vmem>>, vector<1x128xf32>
    %c24 = arith.constant 24 : index
    %c0_22 = arith.constant 0 : index
    %43 = vector.load %arg4[%c24, %c0_22] : memref<104x128xf32, #tpu.memory_space<vmem>>, vector<32x32xf32>
    %c56 = arith.constant 56 : index
    %c0_23 = arith.constant 0 : index
    %44 = vector.load %arg4[%c56, %c0_23] : memref<104x128xf32, #tpu.memory_space<vmem>>, vector<32x16xf32>
    %c88 = arith.constant 88 : index
    %c0_24 = arith.constant 0 : index
    %45 = vector.load %arg4[%c88, %c0_24] : memref<104x128xf32, #tpu.memory_space<vmem>>, vector<16x128xf32>
    %cst_25 = arith.constant dense<0.000000e+00> : vector<16x32xf32>
    %46 = tpu.matmul %39, %43, %cst_25 {dimension_numbers = #tpu.dot_dimension_numbers<[1], [0], [0], [1], [0, 0, 1, 1], [], []>} : vector<16x32xf32>, vector<32x32xf32>, vector<16x32xf32> -> vector<16x32xf32>
    %47 = vector.broadcast %40 : vector<1x32xf32> to vector<16x32xf32>
    %48 = arith.addf %46, %47 : vector<16x32xf32>
    %cst_26 = arith.constant 0.000000e+00 : f32
    %49 = vector.broadcast %cst_26 : f32 to vector<16x32xf32>
    %50 = arith.maximumf %48, %49 : vector<16x32xf32>
    %cst_27 = arith.constant dense<0.000000e+00> : vector<16x16xf32>
    %51 = tpu.matmul %50, %44, %cst_27 {dimension_numbers = #tpu.dot_dimension_numbers<[1], [0], [0], [1], [0, 0, 1, 1], [], []>} : vector<16x32xf32>, vector<32x16xf32>, vector<16x16xf32> -> vector<16x16xf32>
    %52 = vector.broadcast %41 : vector<1x16xf32> to vector<16x16xf32>
    %53 = arith.addf %51, %52 : vector<16x16xf32>
    %cst_28 = arith.constant 0.000000e+00 : f32
    %54 = vector.broadcast %cst_28 : f32 to vector<16x16xf32>
    %55 = arith.maximumf %53, %54 : vector<16x16xf32>
    %cst_29 = arith.constant dense<0.000000e+00> : vector<16x128xf32>
    %56 = tpu.matmul %55, %45, %cst_29 {dimension_numbers = #tpu.dot_dimension_numbers<[1], [0], [0], [1], [0, 0, 1, 1], [], []>} : vector<16x16xf32>, vector<16x128xf32>, vector<16x128xf32> -> vector<16x128xf32>
    %57 = vector.broadcast %42 : vector<1x128xf32> to vector<16x128xf32>
    %58 = arith.addf %56, %57 : vector<16x128xf32>
    %c0_30 = arith.constant 0 : index
    %c0_31 = arith.constant 0 : index
    %59 = vector.load %arg2[%c0_30, %c0_31] : memref<16x1xf32, #tpu.memory_space<vmem>>, vector<16x1xf32>
    %60 = arith.mulf %59, %59 : vector<16x1xf32>
    %61 = vector.broadcast %60 : vector<16x1xf32> to vector<16x128xf32>
    %62 = arith.mulf %58, %61 : vector<16x128xf32>
    %c0_32 = arith.constant 0 : index
    %c0_33 = arith.constant 0 : index
    %63 = vector.load %arg6[%c0_32, %c0_33] : memref<16x128xf32, #tpu.memory_space<vmem>>, vector<16x128xf32>
    tpu.vector_store %arg6[%c0_32, %c0_33], %62 {strides = array<i32>} : memref<16x128xf32, #tpu.memory_space<vmem>>, vector<16x128xf32>,
    return
  }
}

</mosaic_0001>

<llo_original>
// kernel: condition_network_forward.1
$region0: #{condition_network_forward.1}
  #allocation0 [shape = 'u32[]', space=smem, size = 0x4, offset = 0x4, fixed_abs, tag = 'smem constant byte address 0x4 - core index']
  #allocation1 [shape = 'u32[144,128]{1,0:T(1,128)}', space=vmem, size = 0x12000, scoped, tag = 'internal scratch']
  %s0 = inlined_call_operand.vmem [shape: f32[2,16], index: 0, kind: input, shape index: {}]
  %s1 = inlined_call_operand.vmem [shape: f32[16,768], index: 1, kind: input, shape index: {}]
  %s2 = inlined_call_operand.vmem [shape: f32[16,1], index: 2, kind: input, shape index: {}]
  %s3 = inlined_call_operand.vmem [shape: f32[768,96], index: 3, kind: input, shape index: {}]
  %s4 = inlined_call_operand.vmem [shape: f32[104,128], index: 4, kind: input, shape index: {}]
  %s5 = inlined_call_operand.vmem [shape: f32[512,80], index: 5, kind: input, shape index: {}]
  %s6 = inlined_call_operand.vmem [shape: f32[16,128], index: 6, kind: output, shape index: {}]
  %s7 = sld [smem:[#allocation0]]
  $region34: #{condition_network_forward.1} parent=0
    _
  %s9 = ssub.s32 1, %s7
  %s10 = scalar_select 0, %s9, %s7
  // Predicated region
  $region2: #{condition_network_forward.1} parent=0 // pred_check
    _
  $region3: #{condition_network_forward.1} parent=0 // pred_check_branch
    %12 = sbr.rel (0) target = $region5
  $region4: #{condition_network_forward.1} parent=0 // pred_region
    _
  $region5: #{condition_network_forward.1} parent=0 // pred_fallthru
    _
  // Predicated region
  $region6: #{condition_network_forward.1} parent=0 // pred_check
    _
  $region7: #{condition_network_forward.1} parent=0 // pred_check_branch
    %14 = sbr.rel (0) target = $region9
  $region8: #{condition_network_forward.1} parent=0 // pred_region
    _
  $region9: #{condition_network_forward.1} parent=0 // pred_fallthru
    _
  // Predicated region
  $region10: #{condition_network_forward.1} parent=0 // pred_check
    _
  $region11: #{condition_network_forward.1} parent=0 // pred_check_branch
    %16 = sbr.rel (0) target = $region13
  $region12: #{condition_network_forward.1} parent=0 // pred_region
    _
  $region13: #{condition_network_forward.1} parent=0 // pred_fallthru
    _
  // Predicated region
  $region14: #{condition_network_forward.1} parent=0 // pred_check
    _
  $region15: #{condition_network_forward.1} parent=0 // pred_check_branch
    %18 = sbr.rel (0) target = $region17
  $region16: #{condition_network_forward.1} parent=0 // pred_region
    _
  $region17: #{condition_network_forward.1} parent=0 // pred_fallthru
    _
  // Predicated region
  $region18: #{condition_network_forward.1} parent=0 // pred_check
    _
  $region19: #{condition_network_forward.1} parent=0 // pred_check_branch
    %20 = sbr.rel (0) target = $region21
  $region20: #{condition_network_forward.1} parent=0 // pred_region
    _
  $region21: #{condition_network_forward.1} parent=0 // pred_fallthru
    _
  // Predicated region
  $region22: #{condition_network_forward.1} parent=0 // pred_check
    _
  $region23: #{condition_network_forward.1} parent=0 // pred_check_branch
    %22 = sbr.rel (0) target = $region25
  $region24: #{condition_network_forward.1} parent=0 // pred_region
    _
  $region25: #{condition_network_forward.1} parent=0 // pred_fallthru
    _
  %v23 = vld [vmem:[%s4] sm:$0x1]
  %v24 = vld [vmem:[%s1] sm:$0xff]
  %v25 = vld [vmem:[%s1 + $0x8] sm:$0xff]
  %v26 = vld [vmem:[%s1 + $0x10] sm:$0xff]
  %v27 = vld [vmem:[%s1 + $0x18] sm:$0xff]
  %v28 = vld [vmem:[%s1 + $0x20] sm:$0xff]
  %v29 = vld [vmem:[%s1 + $0x28] sm:$0xff]
  %v30 = vld [vmem:[%s1 + $0x30] sm:$0xff]
  %v31 = vld [vmem:[%s1 + $0x38] sm:$0xff]
  %v32 = vld [vmem:[%s1 + $0x40] sm:$0xff]
  %v33 = vld [vmem:[%s1 + $0x48] sm:$0xff]
  %v34 = vld [vmem:[%s1 + $0x50] sm:$0xff]
  %v35 = vld [vmem:[%s1 + $0x58] sm:$0xff]
  %v36 = vld [vmem:[%s3] sm:$0xff]
  %v37 = vld [vmem:[%s3 + $0x8] sm:$0xff]
  %v38 = vld [vmem:[%s3 + $0x10] sm:$0xff]
  %v39 = vld [vmem:[%s3 + $0x18] sm:$0xff]
  %v40 = vld [vmem:[%s3 + $0x20] sm:$0xff]
  %v41 = vld [vmem:[%s3 + $0x28] sm:$0xff]
  %v42 = vld [vmem:[%s3 + $0x30] sm:$0xff]
  %v43 = vld [vmem:[%s3 + $0x38] sm:$0xff]
  %v44 = vld [vmem:[%s3 + $0x40] sm:$0xff]
  %v45 = vld [vmem:[%s3 + $0x48] sm:$0xff]
  %v46 = vld [vmem:[%s3 + $0x50] sm:$0xff]
  %v47 = vld [vmem:[%s3 + $0x58] sm:$0xff]
  %v48 = vld [vmem:[%s3 + $0x60] sm:$0xff]
  %v49 = vld [vmem:[%s3 + $0x68] sm:$0xff]
  %v50 = vld [vmem:[%s3 + $0x70] sm:$0xff]
  %v51 = vld [vmem:[%s3 + $0x78] sm:$0xff]
  %v52 = vld [vmem:[%s3 + $0x80] sm:$0xff]
  %v53 = vld [vmem:[%s3 + $0x88] sm:$0xff]
  %v54 = vld [vmem:[%s3 + $0x90] sm:$0xff]
  %v55 = vld [vmem:[%s3 + $0x98] sm:$0xff]
  %v56 = vld [vmem:[%s3 + $0xa0] sm:$0xff]
  %v57 = vld [vmem:[%s3 + $0xa8] sm:$0xff]
  %v58 = vld [vmem:[%s3 + $0xb0] sm:$0xff]
  %v59 = vld [vmem:[%s3 + $0xb8] sm:$0xff]
  %v60 = vld [vmem:[%s3 + $0xc0] sm:$0xff]
  %v61 = vld [vmem:[%s3 + $0xc8] sm:$0xff]
  %v62 = vld [vmem:[%s3 + $0xd0] sm:$0xff]
  %v63 = vld [vmem:[%s3 + $0xd8] sm:$0xff]
  %v64 = vld [vmem:[%s3 + $0xe0] sm:$0xff]
  %v65 = vld [vmem:[%s3 + $0xe8] sm:$0xff]
  %v66 = vld [vmem:[%s3 + $0xf0] sm:$0xff]
  %v67 = vld [vmem:[%s3 + $0xf8] sm:$0xff]
  %v68 = vld [vmem:[%s3 + $0x100] sm:$0xff]
  %v69 = vld [vmem:[%s3 + $0x108] sm:$0xff]
  %v70 = vld [vmem:[%s3 + $0x110] sm:$0xff]
  %v71 = vld [vmem:[%s3 + $0x118] sm:$0xff]
  %v72 = vld [vmem:[%s3 + $0x120] sm:$0xff]
  %v73 = vld [vmem:[%s3 + $0x128] sm:$0xff]
  %v74 = vld [vmem:[%s3 + $0x130] sm:$0xff]
  %v75 = vld [vmem:[%s3 + $0x138] sm:$0xff]
  %v76 = vld [vmem:[%s3 + $0x140] sm:$0xff]
  %v77 = vld [vmem:[%s3 + $0x148] sm:$0xff]
  %v78 = vld [vmem:[%s3 + $0x150] sm:$0xff]
  %v79 = vld [vmem:[%s3 + $0x158] sm:$0xff]
  %v80 = vld [vmem:[%s3 + $0x160] sm:$0xff]
  %v81 = vld [vmem:[%s3 + $0x168] sm:$0xff]
  %v82 = vld [vmem:[%s3 + $0x170] sm:$0xff]
  %v83 = vld [vmem:[%s3 + $0x178] sm:$0xff]
  %v84 = vld [vmem:[%s3 + $0x180] sm:$0xff]
  %v85 = vld [vmem:[%s3 + $0x188] sm:$0xff]
  %v86 = vld [vmem:[%s3 + $0x190] sm:$0xff]
  %v87 = vld [vmem:[%s3 + $0x198] sm:$0xff]
  %v88 = vld [vmem:[%s3 + $0x1a0] sm:$0xff]
  %v89 = vld [vmem:[%s3 + $0x1a8] sm:$0xff]
  %v90 = vld [vmem:[%s3 + $0x1b0] sm:$0xff]
  %v91 = vld [vmem:[%s3 + $0x1b8] sm:$0xff]
  %v92 = vld [vmem:[%s3 + $0x1c0] sm:$0xff]
  %v93 = vld [vmem:[%s3 + $0x1c8] sm:$0xff]
  %v94 = vld [vmem:[%s3 + $0x1d0] sm:$0xff]
  %v95 = vld [vmem:[%s3 + $0x1d8] sm:$0xff]
  %v96 = vld [vmem:[%s3 + $0x1e0] sm:$0xff]
  %v97 = vld [vmem:[%s3 + $0x1e8] sm:$0xff]
  %v98 = vld [vmem:[%s3 + $0x1f0] sm:$0xff]
  %v99 = vld [vmem:[%s3 + $0x1f8] sm:$0xff]
  %v100 = vld [vmem:[%s3 + $0x200] sm:$0xff]
  %v101 = vld [vmem:[%s3 + $0x208] sm:$0xff]
  %v102 = vld [vmem:[%s3 + $0x210] sm:$0xff]
  %v103 = vld [vmem:[%s3 + $0x218] sm:$0xff]
  %v104 = vld [vmem:[%s3 + $0x220] sm:$0xff]
  %v105 = vld [vmem:[%s3 + $0x228] sm:$0xff]
  %v106 = vld [vmem:[%s3 + $0x230] sm:$0xff]
  %v107 = vld [vmem:[%s3 + $0x238] sm:$0xff]
  %v108 = vld [vmem:[%s3 + $0x240] sm:$0xff]
  %v109 = vld [vmem:[%s3 + $0x248] sm:$0xff]
  %v110 = vld [vmem:[%s3 + $0x250] sm:$0xff]
  %v111 = vld [vmem:[%s3 + $0x258] sm:$0xff]
  %v112 = vld [vmem:[%s3 + $0x260] sm:$0xff]
  %v113 = vld [vmem:[%s3 + $0x268] sm:$0xff]
  %v114 = vld [vmem:[%s3 + $0x270] sm:$0xff]
  %v115 = vld [vmem:[%s3 + $0x278] sm:$0xff]
  %v116 = vld [vmem:[%s3 + $0x280] sm:$0xff]
  %v117 = vld [vmem:[%s3 + $0x288] sm:$0xff]
  %v118 = vld [vmem:[%s3 + $0x290] sm:$0xff]
  %v119 = vld [vmem:[%s3 + $0x298] sm:$0xff]
  %v120 = vld [vmem:[%s3 + $0x2a0] sm:$0xff]
  %v121 = vld [vmem:[%s3 + $0x2a8] sm:$0xff]
  %v122 = vld [vmem:[%s3 + $0x2b0] sm:$0xff]
  %v123 = vld [vmem:[%s3 + $0x2b8] sm:$0xff]
  %v124 = vld [vmem:[%s3 + $0x2c0] sm:$0xff]
  %v125 = vld [vmem:[%s3 + $0x2c8] sm:$0xff]
  %v126 = vld [vmem:[%s3 + $0x2d0] sm:$0xff]
  %v127 = vld [vmem:[%s3 + $0x2d8] sm:$0xff]
  %v128 = vld [vmem:[%s3 + $0x2e0] sm:$0xff]
  %v129 = vld [vmem:[%s3 + $0x2e8] sm:$0xff]
  %v130 = vld [vmem:[%s3 + $0x2f0] sm:$0xff]
  %v131 = vld [vmem:[%s3 + $0x2f8] sm:$0xff]
  %v132 = vlaneseq
  %v133 = vshrl.u32 %v132, 7
  %v134 = vsub.s32 0, %v133
  %v135 = vrot.slane %v23, %v134
  %136 = vmatprep.subr.mxu0 0.0
  %137 = vmatpush1.msra.mxu0 %v36
  %138 = vmatprep.subr.mxu0 0.0
  %139 = vmatpush1.msra.mxu0 %v37
  %140 = vmatprep.subr.mxu0 0.0
  %141 = vmatpush1.msra.mxu0 %v38
  %142 = vmatprep.subr.mxu0 0.0
  %143 = vmatpush1.msra.mxu0 %v39
  %144 = vmatprep.subr.mxu0 0.0
  %145 = vmatpush1.msra.mxu0 %v40
  %146 = vmatprep.subr.mxu0 0.0
  %147 = vmatpush1.msra.mxu0 %v41
  %148 = vmatprep.subr.mxu0 0.0
  %149 = vmatpush1.msra.mxu0 %v42
  %150 = vmatprep.subr.mxu0 0.0
  %151 = vmatpush1.msra.mxu0 %v43
  %152 = vmatprep.subr.mxu0 0.0
  %153 = vmatpush1.msra.mxu0 %v44
  %154 = vmatprep.subr.mxu0 0.0
  %155 = vmatpush1.msra.mxu0 %v45
  %156 = vmatprep.subr.mxu0 0.0
  %157 = vmatpush1.msra.mxu0 %v46
  %158 = vmatprep.subr.mxu0 0.0
  %159 = vmatpush1.msra.mxu0 %v47
  %160 = vmatprep.subr.mxu0 0.0
  %161 = vmatpush1.msra.mxu0 %v48
  %162 = vmatprep.subr.mxu0 0.0
  %163 = vmatpush1.msra.mxu0 %v49
  %164 = vmatprep.subr.mxu0 0.0
  %165 = vmatpush1.msra.mxu0 %v50
  %166 = vmatprep.subr.mxu0 0.0
  %167 = vmatpush1.msra.mxu0 %v51
  %168 = vmatprep.subr.mxu0 0.0
  %169 = vmatpush1.msra.mxu0 %v52
  %170 = vmatprep.subr.mxu0 0.0
  %171 = vmatpush1.msra.mxu0 %v53
  %172 = vmatprep.subr.mxu0 0.0
  %173 = vmatpush1.msra.mxu0 %v54
  %174 = vmatprep.subr.mxu0 0.0
  %175 = vmatpush1.msra.mxu0 %v55
  %176 = vmatprep.subr.mxu0 0.0
  %177 = vmatpush1.msra.mxu0 %v56
  %178 = vmatprep.subr.mxu0 0.0
  %179 = vmatpush1.msra.mxu0 %v57
  %180 = vmatprep.subr.mxu0 0.0
  %181 = vmatpush1.msra.mxu0 %v58
  %182 = vmatprep.subr.mxu0 0.0
  %183 = vmatpush1.msra.mxu0 %v59
  %184 = vmatprep.subr.mxu0 0.0
  %185 = vmatpush1.msra.mxu0 %v60
  %186 = vmatprep.subr.mxu0 0.0
  %187 = vmatpush1.msra.mxu0 %v61
  %188 = vmatprep.subr.mxu0 0.0
  %189 = vmatpush1.msra.mxu0 %v62
  %190 = vmatprep.subr.mxu0 0.0
  %191 = vmatpush1.msra.mxu0 %v63
  %192 = vmatprep.subr.mxu0 0.0
  %193 = vmatpush1.msra.mxu0 %v64
  %194 = vmatprep.subr.mxu0 0.0
  %195 = vmatpush1.msra.mxu0 %v65
  %196 = vmatprep.subr.mxu0 0.0
  %197 = vmatpush1.msra.mxu0 %v66
  %198 = vmatprep.subr.mxu0 0.0
  %199 = vmatpush1.msra.mxu0 %v67
  %200 = vmatprep.mubr.f32.mxu0 %v25
  %201 = vmatmul.mubr.f32.gmra.mrb[0].mxu0 %v24
  %v202 = vpop.f32.mrb[0].mxu0
  %v203 = vadd.f32 %v135, %v202
  %v204 = vpop.f32.mrb[0].mxu0
  %205 = vmatprep.mubr.f32.mxu0 %v31
  %206 = vmatmul.mubr.f32.gmra.mrb[0].mxu0 %v30
  %v207 = vpop.f32.mrb[0].mxu0
  %v208 = vadd.f32 %v135, %v207
  %v209 = vpop.f32.mrb[0].mxu0
  %210 = vdwg.mxu0
  %211 = vmatprep.subr.mxu0 0.0
  %212 = vmatpush1.msra.mxu0 %v68
  %213 = vmatprep.subr.mxu0 0.0
  %214 = vmatpush1.msra.mxu0 %v69
  %215 = vmatprep.subr.mxu0 0.0
  %216 = vmatpush1.msra.mxu0 %v70
  %217 = vmatprep.subr.mxu0 0.0
  %218 = vmatpush1.msra.mxu0 %v71
  %219 = vmatprep.subr.mxu0 0.0
  %220 = vmatpush1.msra.mxu0 %v72
  %221 = vmatprep.subr.mxu0 0.0
  %222 = vmatpush1.msra.mxu0 %v73
  %223 = vmatprep.subr.mxu0 0.0
  %224 = vmatpush1.msra.mxu0 %v74
  %225 = vmatprep.subr.mxu0 0.0
  %226 = vmatpush1.msra.mxu0 %v75
  %227 = vmatprep.subr.mxu0 0.0
  %228 = vmatpush1.msra.mxu0 %v76
  %229 = vmatprep.subr.mxu0 0.0
  %230 = vmatpush1.msra.mxu0 %v77
  %231 = vmatprep.subr.mxu0 0.0
  %232 = vmatpush1.msra.mxu0 %v78
  %233 = vmatprep.subr.mxu0 0.0
  %234 = vmatpush1.msra.mxu0 %v79
  %235 = vmatprep.subr.mxu0 0.0
  %236 = vmatpush1.msra.mxu0 %v80
  %237 = vmatprep.subr.mxu0 0.0
  %238 = vmatpush1.msra.mxu0 %v81
  %239 = vmatprep.subr.mxu0 0.0
  %240 = vmatpush1.msra.mxu0 %v82
  %241 = vmatprep.subr.mxu0 0.0
  %242 = vmatpush1.msra.mxu0 %v83
  %243 = vmatprep.subr.mxu0 0.0
  %244 = vmatpush1.msra.mxu0 %v84
  %245 = vmatprep.subr.mxu0 0.0
  %246 = vmatpush1.msra.mxu0 %v85
  %247 = vmatprep.subr.mxu0 0.0
  %248 = vmatpush1.msra.mxu0 %v86
  %249 = vmatprep.subr.mxu0 0.0
  %250 = vmatpush1.msra.mxu0 %v87
  %251 = vmatprep.subr.mxu0 0.0
  %252 = vmatpush1.msra.mxu0 %v88
  %253 = vmatprep.subr.mxu0 0.0
  %254 = vmatpush1.msra.mxu0 %v89
  %255 = vmatprep.subr.mxu0 0.0
  %256 = vmatpush1.msra.mxu0 %v90
  %257 = vmatprep.subr.mxu0 0.0
  %258 = vmatpush1.msra.mxu0 %v91
  %259 = vmatprep.subr.mxu0 0.0
  %260 = vmatpush1.msra.mxu0 %v92
  %261 = vmatprep.subr.mxu0 0.0
  %262 = vmatpush1.msra.mxu0 %v93
  %263 = vmatprep.subr.mxu0 0.0
  %264 = vmatpush1.msra.mxu0 %v94
  %265 = vmatprep.subr.mxu0 0.0
  %266 = vmatpush1.msra.mxu0 %v95
  %267 = vmatprep.subr.mxu0 0.0
  %268 = vmatpush1.msra.mxu0 %v96
  %269 = vmatprep.subr.mxu0 0.0
  %270 = vmatpush1.msra.mxu0 %v97
  %271 = vmatprep.subr.mxu0 0.0
  %272 = vmatpush1.msra.mxu0 %v98
  %273 = vmatprep.subr.mxu0 0.0
  %274 = vmatpush1.msra.mxu0 %v99
  %275 = vmatprep.mubr.f32.mxu0 %v27
  %276 = vmatmul.mubr.f32.gmra.mrb[0].mxu0 %v26
  %v277 = vpop.f32.mrb[0].mxu0
  %v278 = vadd.f32 %v203, %v277
  %v279 = vpop.f32.mrb[0].mxu0
  %280 = vmatprep.mubr.f32.mxu0 %v33
  %281 = vmatmul.mubr.f32.gmra.mrb[0].mxu0 %v32
  %v282 = vpop.f32.mrb[0].mxu0
  %v283 = vadd.f32 %v208, %v282
  %v284 = vpop.f32.mrb[0].mxu0
  %285 = vdwg.mxu0
  %286 = vmatprep.subr.mxu0 0.0
  %287 = vmatpush1.msra.mxu0 %v100
  %288 = vmatprep.subr.mxu0 0.0
  %289 = vmatpush1.msra.mxu0 %v101
  %290 = vmatprep.subr.mxu0 0.0
  %291 = vmatpush1.msra.mxu0 %v102
  %292 = vmatprep.subr.mxu0 0.0
  %293 = vmatpush1.msra.mxu0 %v103
  %294 = vmatprep.subr.mxu0 0.0
  %295 = vmatpush1.msra.mxu0 %v104
  %296 = vmatprep.subr.mxu0 0.0
  %297 = vmatpush1.msra.mxu0 %v105
  %298 = vmatprep.subr.mxu0 0.0
  %299 = vmatpush1.msra.mxu0 %v106
  %300 = vmatprep.subr.mxu0 0.0
  %301 = vmatpush1.msra.mxu0 %v107
  %302 = vmatprep.subr.mxu0 0.0
  %303 = vmatpush1.msra.mxu0 %v108
  %304 = vmatprep.subr.mxu0 0.0
  %305 = vmatpush1.msra.mxu0 %v109
  %306 = vmatprep.subr.mxu0 0.0
  %307 = vmatpush1.msra.mxu0 %v110
  %308 = vmatprep.subr.mxu0 0.0
  %309 = vmatpush1.msra.mxu0 %v111
  %310 = vmatprep.subr.mxu0 0.0
  %311 = vmatpush1.msra.mxu0 %v112
  %312 = vmatprep.subr.mxu0 0.0
  %313 = vmatpush1.msra.mxu0 %v113
  %314 = vmatprep.subr.mxu0 0.0
  %315 = vmatpush1.msra.mxu0 %v114
  %316 = vmatprep.subr.mxu0 0.0
  %317 = vmatpush1.msra.mxu0 %v115
  %318 = vmatprep.subr.mxu0 0.0
  %319 = vmatpush1.msra.mxu0 %v116
  %320 = vmatprep.subr.mxu0 0.0
  %321 = vmatpush1.msra.mxu0 %v117
  %322 = vmatprep.subr.mxu0 0.0
  %323 = vmatpush1.msra.mxu0 %v118
  %324 = vmatprep.subr.mxu0 0.0
  %325 = vmatpush1.msra.mxu0 %v119
  %326 = vmatprep.subr.mxu0 0.0
  %327 = vmatpush1.msra.mxu0 %v120
  %328 = vmatprep.subr.mxu0 0.0
  %329 = vmatpush1.msra.mxu0 %v121
  %330 = vmatprep.subr.mxu0 0.0
  %331 = vmatpush1.msra.mxu0 %v122
  %332 = vmatprep.subr.mxu0 0.0
  %333 = vmatpush1.msra.mxu0 %v123
  %334 = vmatprep.subr.mxu0 0.0
  %335 = vmatpush1.msra.mxu0 %v124
  %336 = vmatprep.subr.mxu0 0.0
  %337 = vmatpush1.msra.mxu0 %v125
  %338 = vmatprep.subr.mxu0 0.0
  %339 = vmatpush1.msra.mxu0 %v126
  %340 = vmatprep.subr.mxu0 0.0
  %341 = vmatpush1.msra.mxu0 %v127
  %342 = vmatprep.subr.mxu0 0.0
  %343 = vmatpush1.msra.mxu0 %v128
  %344 = vmatprep.subr.mxu0 0.0
  %345 = vmatpush1.msra.mxu0 %v129
  %346 = vmatprep.subr.mxu0 0.0
  %347 = vmatpush1.msra.mxu0 %v130
  %348 = vmatprep.subr.mxu0 0.0
  %349 = vmatpush1.msra.mxu0 %v131
  %350 = vmatprep.mubr.f32.mxu0 %v29
  %351 = vmatmul.mubr.f32.gmra.mrb[0].mxu0 %v28
  %v352 = vpop.f32.mrb[0].mxu0
  %v353 = vadd.f32 %v278, %v352
  %v354 = vpop.f32.mrb[0].mxu0
  %355 = vmatprep.mubr.f32.mxu0 %v35
  %356 = vmatmul.mubr.f32.gmra.mrb[0].mxu0 %v34
  %v357 = vpop.f32.mrb[0].mxu0
  %v358 = vadd.f32 %v283, %v357
  %v359 = vpop.f32.mrb[0].mxu0
  %360 = vdwg.mxu0
  %v361 = vld [vmem:[%s4 + $0x8] sm:$0xff]
  %v362 = vld [vmem:[%s4 + $0x10] sm:$0xff]
  %v363 = vld [vmem:[%s0] sm:$0x3]
  %vm364 = vcmask 130048
  %v366 = vsel %vm364, %v363, 0
  %368 = vmatprep.subr.mxu0 0.0
  %369 = vmatpush1.msra.mxu0 %v361
  %370 = vmatprep.subr.mxu0 0.0
  %371 = vmatpush1.msra.mxu0 %v362
  %372 = vmatprep.subr.mxu0 0.0
  %373 = vmatpush1.msra.mxu0 0.0
  %374 = vmatprep.subr.mxu0 0.0
  %375 = vmatpush1.msra.mxu0 0.0
  %376 = vmatprep.subr.mxu0 0.0
  %377 = vmatpush1.msra.mxu0 0.0
  %378 = vmatprep.subr.mxu0 0.0
  %379 = vmatpush1.msra.mxu0 0.0
  %380 = vmatprep.subr.mxu0 0.0
  %381 = vmatpush1.msra.mxu0 0.0
  %382 = vmatprep.subr.mxu0 0.0
  %383 = vmatpush1.msra.mxu0 0.0
  %384 = vmatprep.subr.mxu0 0.0
  %385 = vmatpush1.msra.mxu0 0.0
  %386 = vmatprep.subr.mxu0 0.0
  %387 = vmatpush1.msra.mxu0 0.0
  %388 = vmatprep.subr.mxu0 0.0
  %389 = vmatpush1.msra.mxu0 0.0
  %390 = vmatprep.subr.mxu0 0.0
  %391 = vmatpush1.msra.mxu0 0.0
  %392 = vmatprep.subr.mxu0 0.0
  %393 = vmatpush1.msra.mxu0 0.0
  %394 = vmatprep.subr.mxu0 0.0
  %395 = vmatpush1.msra.mxu0 0.0
  %396 = vmatprep.subr.mxu0 0.0
  %397 = vmatpush1.msra.mxu0 0.0
  %398 = vmatprep.subr.mxu0 0.0
  %399 = vmatpush1.msra.mxu0 0.0
  %400 = vmatprep.subr.mxu0 0.0
  %401 = vmatpush1.msra.mxu0 0.0
  %402 = vmatprep.subr.mxu0 0.0
  %403 = vmatpush1.msra.mxu0 0.0
  %404 = vmatprep.subr.mxu0 0.0
  %405 = vmatpush1.msra.mxu0 0.0
  %406 = vmatprep.subr.mxu0 0.0
  %407 = vmatpush1.msra.mxu0 0.0
  %408 = vmatprep.subr.mxu0 0.0
  %409 = vmatpush1.msra.mxu0 0.0
  %410 = vmatprep.subr.mxu0 0.0
  %411 = vmatpush1.msra.mxu0 0.0
  %412 = vmatprep.subr.mxu0 0.0
  %413 = vmatpush1.msra.mxu0 0.0
  %414 = vmatprep.subr.mxu0 0.0
  %415 = vmatpush1.msra.mxu0 0.0
  %416 = vmatprep.subr.mxu0 0.0
  %417 = vmatpush1.msra.mxu0 0.0
  %418 = vmatprep.subr.mxu0 0.0
  %419 = vmatpush1.msra.mxu0 0.0
  %420 = vmatprep.subr.mxu0 0.0
  %421 = vmatpush1.msra.mxu0 0.0
  %422 = vmatprep.subr.mxu0 0.0
  %423 = vmatpush1.msra.mxu0 0.0
  %424 = vmatprep.subr.mxu0 0.0
  %425 = vmatpush1.msra.mxu0 0.0
  %426 = vmatprep.subr.mxu0 0.0
  %427 = vmatpush1.msra.mxu0 0.0
  %428 = vmatprep.subr.mxu0 0.0
  %429 = vmatpush1.msra.mxu0 0.0
  %430 = vmatprep.subr.mxu0 0.0
  %431 = vmatpush1.msra.mxu0 0.0
  %432 = vmatprep.mubr.f32.mxu0 0.0
  %433 = vmatmul.mubr.f32.gmra.mrb[0].mxu0 %v366
  %v434 = vpop.f32.mrb[0].mxu0
  %v435 = vadd.f32 0.0, %v434
  %v436 = vpop.f32.mrb[0].mxu0
  %437 = vdwg.mxu0
  %v438 = vld [vmem:[%s5] sm:$0xff]
  %v439 = vld [vmem:[%s5 + $0x8] sm:$0xff]
  %v440 = vld [vmem:[%s5 + $0x10] sm:$0xff]
  %v441 = vld [vmem:[%s5 + $0x18] sm:$0xff]
  %v442 = vld [vmem:[%s5 + $0x20] sm:$0xff]
  %v443 = vld [vmem:[%s5 + $0x28] sm:$0xff]
  %v444 = vld [vmem:[%s5 + $0x30] sm:$0xff]
  %v445 = vld [vmem:[%s5 + $0x38] sm:$0xff]
  %v446 = vld [vmem:[%s5 + $0x40] sm:$0xff]
  %v447 = vld [vmem:[%s5 + $0x48] sm:$0xff]
  %v448 = vld [vmem:[%s5 + $0x50] sm:$0xff]
  %v449 = vld [vmem:[%s5 + $0x58] sm:$0xff]
  %v450 = vld [vmem:[%s5 + $0x60] sm:$0xff]
  %v451 = vld [vmem:[%s5 + $0x68] sm:$0xff]
  %v452 = vld [vmem:[%s5 + $0x70] sm:$0xff]
  %v453 = vld [vmem:[%s5 + $0x78] sm:$0xff]
  %v454 = vld [vmem:[%s5 + $0x80] sm:$0xff]
  %v455 = vld [vmem:[%s5 + $0x88] sm:$0xff]
  %v456 = vld [vmem:[%s5 + $0x90] sm:$0xff]
  %v457 = vld [vmem:[%s5 + $0x98] sm:$0xff]
  %v458 = vld [vmem:[%s5 + $0xa0] sm:$0xff]
  %v459 = vld [vmem:[%s5 + $0xa8] sm:$0xff]
  %v460 = vld [vmem:[%s5 + $0xb0] sm:$0xff]
  %v461 = vld [vmem:[%s5 + $0xb8] sm:$0xff]
  %v462 = vld [vmem:[%s5 + $0xc0] sm:$0xff]
  %v463 = vld [vmem:[%s5 + $0xc8] sm:$0xff]
  %v464 = vld [vmem:[%s5 + $0xd0] sm:$0xff]
  %v465 = vld [vmem:[%s5 + $0xd8] sm:$0xff]
  %v466 = vld [vmem:[%s5 + $0xe0] sm:$0xff]
  %v467 = vld [vmem:[%s5 + $0xe8] sm:$0xff]
  %v468 = vld [vmem:[%s5 + $0xf0] sm:$0xff]
  %v469 = vld [vmem:[%s5 + $0xf8] sm:$0xff]
  %v470 = vld [vmem:[%s5 + $0x100] sm:$0xff]
  %v471 = vld [vmem:[%s5 + $0x108] sm:$0xff]
  %v472 = vld [vmem:[%s5 + $0x110] sm:$0xff]
  %v473 = vld [vmem:[%s5 + $0x118] sm:$0xff]
  %v474 = vld [vmem:[%s5 + $0x120] sm:$0xff]
  %v475 = vld [vmem:[%s5 + $0x128] sm:$0xff]
  %v476 = vld [vmem:[%s5 + $0x130] sm:$0xff]
  %v477 = vld [vmem:[%s5 + $0x138] sm:$0xff]
  %v478 = vld [vmem:[%s5 + $0x140] sm:$0xff]
  %v479 = vld [vmem:[%s5 + $0x148] sm:$0xff]
  %v480 = vld [vmem:[%s5 + $0x150] sm:$0xff]
  %v481 = vld [vmem:[%s5 + $0x158] sm:$0xff]
  %v482 = vld [vmem:[%s5 + $0x160] sm:$0xff]
  %v483 = vld [vmem:[%s5 + $0x168] sm:$0xff]
  %v484 = vld [vmem:[%s5 + $0x170] sm:$0xff]
  %v485 = vld [vmem:[%s5 + $0x178] sm:$0xff]
  %v486 = vld [vmem:[%s5 + $0x180] sm:$0xff]
  %v487 = vld [vmem:[%s5 + $0x188] sm:$0xff]
  %v488 = vld [vmem:[%s5 + $0x190] sm:$0xff]
  %v489 = vld [vmem:[%s5 + $0x198] sm:$0xff]
  %v490 = vld [vmem:[%s5 + $0x1a0] sm:$0xff]
  %v491 = vld [vmem:[%s5 + $0x1a8] sm:$0xff]
  %v492 = vld [vmem:[%s5 + $0x1b0] sm:$0xff]
  %v493 = vld [vmem:[%s5 + $0x1b8] sm:$0xff]
  %v494 = vld [vmem:[%s5 + $0x1c0] sm:$0xff]
  %v495 = vld [vmem:[%s5 + $0x1c8] sm:$0xff]
  %v496 = vld [vmem:[%s5 + $0x1d0] sm:$0xff]
  %v497 = vld [vmem:[%s5 + $0x1d8] sm:$0xff]
  %v498 = vld [vmem:[%s5 + $0x1e0] sm:$0xff]
  %v499 = vld [vmem:[%s5 + $0x1e8] sm:$0xff]
  %v500 = vld [vmem:[%s5 + $0x1f0] sm:$0xff]
  %v501 = vld [vmem:[%s5 + $0x1f8] sm:$0xff]
  %504 = vrot.lane.b32.xlu0 %v353, 96
  %v505 = vpop.permute.xlu0 %504
  %506 = vrot.lane.b32.xlu0 %v358, 96
  %v507 = vpop.permute.xlu0 %506
  %v511 = vsel %vm364, %v438, 0
  %v514 = vsel %vm364, %v439, 0
  %v517 = vsel %vm364, %v440, 0
  %v520 = vsel %vm364, %v441, 0
  %v523 = vsel %vm364, %v442, 0
  %v526 = vsel %vm364, %v443, 0
  %v529 = vsel %vm364, %v444, 0
  %v532 = vsel %vm364, %v445, 0
  %v535 = vsel %vm364, %v446, 0
  %v538 = vsel %vm364, %v447, 0
  %v541 = vsel %vm364, %v448, 0
  %v544 = vsel %vm364, %v449, 0
  %v547 = vsel %vm364, %v450, 0
  %v550 = vsel %vm364, %v451, 0
  %v553 = vsel %vm364, %v452, 0
  %v556 = vsel %vm364, %v453, 0
  %v559 = vsel %vm364, %v454, 0
  %v562 = vsel %vm364, %v455, 0
  %v565 = vsel %vm364, %v456, 0
  %v568 = vsel %vm364, %v457, 0
  %v571 = vsel %vm364, %v458, 0
  %v574 = vsel %vm364, %v459, 0
  %v577 = vsel %vm364, %v460, 0
  %v580 = vsel %vm364, %v461, 0
  %v583 = vsel %vm364, %v462, 0
  %v586 = vsel %vm364, %v463, 0
  %v589 = vsel %vm364, %v464, 0
  %v592 = vsel %vm364, %v465, 0
  %v595 = vsel %vm364, %v466, 0
  %v598 = vsel %vm364, %v467, 0
  %v601 = vsel %vm364, %v468, 0
  %v604 = vsel %vm364, %v469, 0
  %v607 = vsel %vm364, %v470, 0
  %v610 = vsel %vm364, %v471, 0
  %v613 = vsel %vm364, %v472, 0
  %v616 = vsel %vm364, %v473, 0
  %v619 = vsel %vm364, %v474, 0
  %v622 = vsel %vm364, %v475, 0
  %v625 = vsel %vm364, %v476, 0
  %v628 = vsel %vm364, %v477, 0
  %v631 = vsel %vm364, %v478, 0
  %v634 = vsel %vm364, %v479, 0
  %v637 = vsel %vm364, %v480, 0
  %v640 = vsel %vm364, %v481, 0
  %v643 = vsel %vm364, %v482, 0
  %v646 = vsel %vm364, %v483, 0
  %v649 = vsel %vm364, %v484, 0
  %v652 = vsel %vm364, %v485, 0
  %v655 = vsel %vm364, %v486, 0
  %v658 = vsel %vm364, %v487, 0
  %v661 = vsel %vm364, %v488, 0
  %v664 = vsel %vm364, %v489, 0
  %v667 = vsel %vm364, %v490, 0
  %v670 = vsel %vm364, %v491, 0
  %v673 = vsel %vm364, %v492, 0
  %v676 = vsel %vm364, %v493, 0
  %v679 = vsel %vm364, %v494, 0
  %v682 = vsel %vm364, %v495, 0
  %v685 = vsel %vm364, %v496, 0
  %v688 = vsel %vm364, %v497, 0
  %v691 = vsel %vm364, %v498, 0
  %v694 = vsel %vm364, %v499, 0
  %v697 = vsel %vm364, %v500, 0
  %v700 = vsel %vm364, %v501, 0
  %702 = vmatprep.subr.mxu0 0.0
  %703 = vmatpush1.msra.mxu0 %v505
  %704 = vmatprep.subr.mxu0 0.0
  %705 = vmatpush1.msra.mxu0 %v507
  %706 = vmatprep.subr.mxu0 0.0
  %707 = vmatpush1.msra.mxu0 0.0
  %708 = vmatprep.subr.mxu0 0.0
  %709 = vmatpush1.msra.mxu0 0.0
  %710 = vmatprep.subr.mxu0 0.0
  %711 = vmatpush1.msra.mxu0 0.0
  %712 = vmatprep.subr.mxu0 0.0
  %713 = vmatpush1.msra.mxu0 0.0
  %714 = vmatprep.subr.mxu0 0.0
  %715 = vmatpush1.msra.mxu0 0.0
  %716 = vmatprep.subr.mxu0 0.0
  %717 = vmatpush1.msra.mxu0 0.0
  %718 = vmatprep.subr.mxu0 0.0
  %719 = vmatpush1.msra.mxu0 0.0
  %720 = vmatprep.subr.mxu0 0.0
  %721 = vmatpush1.msra.mxu0 0.0
  %722 = vmatprep.subr.mxu0 0.0
  %723 = vmatpush1.msra.mxu0 0.0
  %724 = vmatprep.subr.mxu0 0.0
  %725 = vmatpush1.msra.mxu0 0.0
  %726 = vmatprep.subr.mxu0 0.0
  %727 = vmatpush1.msra.mxu0 0.0
  %728 = vmatprep.subr.mxu0 0.0
  %729 = vmatpush1.msra.mxu0 0.0
  %730 = vmatprep.subr.mxu0 0.0
  %731 = vmatpush1.msra.mxu0 0.0
  %732 = vmatprep.subr.mxu0 0.0
  %733 = vmatpush1.msra.mxu0 0.0
  %734 = vmatprep.subr.mxu0 0.0
  %735 = vmatpush1.msra.mxu0 0.0
  %736 = vmatprep.subr.mxu0 0.0
  %737 = vmatpush1.msra.mxu0 0.0
  %738 = vmatprep.subr.mxu0 0.0
  %739 = vmatpush1.msra.mxu0 0.0
  %740 = vmatprep.subr.mxu0 0.0
  %741 = vmatpush1.msra.mxu0 0.0
  %742 = vmatprep.subr.mxu0 0.0
  %743 = vmatpush1.msra.mxu0 0.0
  %744 = vmatprep.subr.mxu0 0.0
  %745 = vmatpush1.msra.mxu0 0.0
  %746 = vmatprep.subr.mxu0 0.0
  %747 = vmatpush1.msra.mxu0 0.0
  %748 = vmatprep.subr.mxu0 0.0
  %749 = vmatpush1.msra.mxu0 0.0
  %750 = vmatprep.subr.mxu0 0.0
  %751 = vmatpush1.msra.mxu0 0.0
  %752 = vmatprep.subr.mxu0 0.0
  %753 = vmatpush1.msra.mxu0 0.0
  %754 = vmatprep.subr.mxu0 0.0
  %755 = vmatpush1.msra.mxu0 0.0
  %756 = vmatprep.subr.mxu0 0.0
  %757 = vmatpush1.msra.mxu0 0.0
  %758 = vmatprep.subr.mxu0 0.0
  %759 = vmatpush1.msra.mxu0 0.0
  %760 = vmatprep.subr.mxu0 0.0
  %761 = vmatpush1.msra.mxu0 0.0
  %762 = vmatprep.subr.mxu0 0.0
  %763 = vmatpush1.msra.mxu0 0.0
  %764 = vmatprep.subr.mxu0 0.0
  %765 = vmatpush1.msra.mxu0 0.0
  %766 = vmatprep.mubr.f32.mxu0 0.0
  %767 = vmatmul.mubr.f32.gmra.mrb[0].mxu0 %v511
  %v768 = vpop.f32.mrb[0].mxu0
  %v769 = vadd.f32 0.0, %v768
  %v770 = vpop.f32.mrb[0].mxu0
  %771 = vmatprep.mubr.f32.mxu0 0.0
  %772 = vmatmul.mubr.f32.gmra.mrb[0].mxu0 %v514
  %v773 = vpop.f32.mrb[0].mxu0
  %v774 = vadd.f32 0.0, %v773
  %v775 = vpop.f32.mrb[0].mxu0
  %776 = vmatprep.mubr.f32.mxu0 0.0
  %777 = vmatmul.mubr.f32.gmra.mrb[0].mxu0 %v517
  %v778 = vpop.f32.mrb[0].mxu0
  %v779 = vadd.f32 0.0, %v778
  %v780 = vpop.f32.mrb[0].mxu0
  %781 = vmatprep.mubr.f32.mxu0 0.0
  %782 = vmatmul.mubr.f32.gmra.mrb[0].mxu0 %v520
  %v783 = vpop.f32.mrb[0].mxu0
  %v784 = vadd.f32 0.0, %v783
  %v785 = vpop.f32.mrb[0].mxu0
  %786 = vmatprep.mubr.f32.mxu0 0.0
  %787 = vmatmul.mubr.f32.gmra.mrb[0].mxu0 %v523
  %v788 = vpop.f32.mrb[0].mxu0
  %v789 = vadd.f32 0.0, %v788
  %v790 = vpop.f32.mrb[0].mxu0
  %791 = vmatprep.mubr.f32.mxu0 0.0
  %792 = vmatmul.mubr.f32.gmra.mrb[0].mxu0 %v526
  %v793 = vpop.f32.mrb[0].mxu0
  %v794 = vadd.f32 0.0, %v793
  %v795 = vpop.f32.mrb[0].mxu0
  %796 = vmatprep.mubr.f32.mxu0 0.0
  %797 = vmatmul.mubr.f32.gmra.mrb[0].mxu0 %v529
  %v798 = vpop.f32.mrb[0].mxu0
  %v799 = vadd.f32 0.0, %v798
  %v800 = vpop.f32.mrb[0].mxu0
  %801 = vmatprep.mubr.f32.mxu0 0.0
  %802 = vmatmul.mubr.f32.gmra.mrb[0].mxu0 %v532
  %v803 = vpop.f32.mrb[0].mxu0
  %v804 = vadd.f32 0.0, %v803
  %v805 = vpop.f32.mrb[0].mxu0
  %806 = vmatprep.mubr.f32.mxu0 0.0
  %807 = vmatmul.mubr.f32.gmra.mrb[0].mxu0 %v535
  %v808 = vpop.f32.mrb[0].mxu0
  %v809 = vadd.f32 0.0, %v808
  %v810 = vpop.f32.mrb[0].mxu0
  %811 = vmatprep.mubr.f32.mxu0 0.0
  %812 = vmatmul.mubr.f32.gmra.mrb[0].mxu0 %v538
  %v813 = vpop.f32.mrb[0].mxu0
  %v814 = vadd.f32 0.0, %v813
  %v815 = vpop.f32.mrb[0].mxu0
  %816 = vmatprep.mubr.f32.mxu0 0.0
  %817 = vmatmul.mubr.f32.gmra.mrb[0].mxu0 %v541
  %v818 = vpop.f32.mrb[0].mxu0
  %v819 = vadd.f32 0.0, %v818
  %v820 = vpop.f32.mrb[0].mxu0
  %821 = vmatprep.mubr.f32.mxu0 0.0
  %822 = vmatmul.mubr.f32.gmra.mrb[0].mxu0 %v544
  %v823 = vpop.f32.mrb[0].mxu0
  %v824 = vadd.f32 0.0, %v823
  %v825 = vpop.f32.mrb[0].mxu0
  %826 = vmatprep.mubr.f32.mxu0 0.0
  %827 = vmatmul.mubr.f32.gmra.mrb[0].mxu0 %v547
  %v828 = vpop.f32.mrb[0].mxu0
  %v829 = vadd.f32 0.0, %v828
  %v830 = vpop.f32.mrb[0].mxu0
  %831 = vmatprep.mubr.f32.mxu0 0.0
  %832 = vmatmul.mubr.f32.gmra.mrb[0].mxu0 %v550
  %v833 = vpop.f32.mrb[0].mxu0
  %v834 = vadd.f32 0.0, %v833
  %v835 = vpop.f32.mrb[0].mxu0
  %836 = vmatprep.mubr.f32.mxu0 0.0
  %837 = vmatmul.mubr.f32.gmra.mrb[0].mxu0 %v553
  %v838 = vpop.f32.mrb[0].mxu0
  %v839 = vadd.f32 0.0, %v838
  %v840 = vpop.f32.mrb[0].mxu0
  %841 = vmatprep.mubr.f32.mxu0 0.0
  %842 = vmatmul.mubr.f32.gmra.mrb[0].mxu0 %v556
  %v843 = vpop.f32.mrb[0].mxu0
  %v844 = vadd.f32 0.0, %v843
  %v845 = vpop.f32.mrb[0].mxu0
  %846 = vmatprep.mubr.f32.mxu0 0.0
  %847 = vmatmul.mubr.f32.gmra.mrb[0].mxu0 %v559
  %v848 = vpop.f32.mrb[0].mxu0
  %v849 = vadd.f32 0.0, %v848
  %v850 = vpop.f32.mrb[0].mxu0
  %851 = vmatprep.mubr.f32.mxu0 0.0
  %852 = vmatmul.mubr.f32.gmra.mrb[0].mxu0 %v562
  %v853 = vpop.f32.mrb[0].mxu0
  %v854 = vadd.f32 0.0, %v853
  %v855 = vpop.f32.mrb[0].mxu0
  %856 = vmatprep.mubr.f32.mxu0 0.0
  %857 = vmatmul.mubr.f32.gmra.mrb[0].mxu0 %v565
  %v858 = vpop.f32.mrb[0].mxu0
  %v859 = vadd.f32 0.0, %v858
  %v860 = vpop.f32.mrb[0].mxu0
  %861 = vmatprep.mubr.f32.mxu0 0.0
  %862 = vmatmul.mubr.f32.gmra.mrb[0].mxu0 %v568
  %v863 = vpop.f32.mrb[0].mxu0
  %v864 = vadd.f32 0.0, %v863
  %v865 = vpop.f32.mrb[0].mxu0
  %866 = vmatprep.mubr.f32.mxu0 0.0
  %867 = vmatmul.mubr.f32.gmra.mrb[0].mxu0 %v571
  %v868 = vpop.f32.mrb[0].mxu0
  %v869 = vadd.f32 0.0, %v868
  %v870 = vpop.f32.mrb[0].mxu0
  %871 = vmatprep.mubr.f32.mxu0 0.0
  %872 = vmatmul.mubr.f32.gmra.mrb[0].mxu0 %v574
  %v873 = vpop.f32.mrb[0].mxu0
  %v874 = vadd.f32 0.0, %v873
  %v875 = vpop.f32.mrb[0].mxu0
  %876 = vmatprep.mubr.f32.mxu0 0.0
  %877 = vmatmul.mubr.f32.gmra.mrb[0].mxu0 %v577
  %v878 = vpop.f32.mrb[0].mxu0
  %v879 = vadd.f32 0.0, %v878
  %v880 = vpop.f32.mrb[0].mxu0
  %881 = vmatprep.mubr.f32.mxu0 0.0
  %882 = vmatmul.mubr.f32.gmra.mrb[0].mxu0 %v580
  %v883 = vpop.f32.mrb[0].mxu0
  %v884 = vadd.f32 0.0, %v883
  %v885 = vpop.f32.mrb[0].mxu0
  %886 = vmatprep.mubr.f32.mxu0 0.0
  %887 = vmatmul.mubr.f32.gmra.mrb[0].mxu0 %v583
  %v888 = vpop.f32.mrb[0].mxu0
  %v889 = vadd.f32 0.0, %v888
  %v890 = vpop.f32.mrb[0].mxu0
  %891 = vmatprep.mubr.f32.mxu0 0.0
  %892 = vmatmul.mubr.f32.gmra.mrb[0].mxu0 %v586
  %v893 = vpop.f32.mrb[0].mxu0
  %v894 = vadd.f32 0.0, %v893
  %v895 = vpop.f32.mrb[0].mxu0
  %896 = vmatprep.mubr.f32.mxu0 0.0
  %897 = vmatmul.mubr.f32.gmra.mrb[0].mxu0 %v589
  %v898 = vpop.f32.mrb[0].mxu0
  %v899 = vadd.f32 0.0, %v898
  %v900 = vpop.f32.mrb[0].mxu0
  %901 = vmatprep.mubr.f32.mxu0 0.0
  %902 = vmatmul.mubr.f32.gmra.mrb[0].mxu0 %v592
  %v903 = vpop.f32.mrb[0].mxu0
  %v904 = vadd.f32 0.0, %v903
  %v905 = vpop.f32.mrb[0].mxu0
  %906 = vmatprep.mubr.f32.mxu0 0.0
  %907 = vmatmul.mubr.f32.gmra.mrb[0].mxu0 %v595
  %v908 = vpop.f32.mrb[0].mxu0
  %v909 = vadd.f32 0.0, %v908
  %v910 = vpop.f32.mrb[0].mxu0
  %911 = vmatprep.mubr.f32.mxu0 0.0
  %912 = vmatmul.mubr.f32.gmra.mrb[0].mxu0 %v598
  %v913 = vpop.f32.mrb[0].mxu0
  %v914 = vadd.f32 0.0, %v913
  %v915 = vpop.f32.mrb[0].mxu0
  %916 = vmatprep.mubr.f32.mxu0 0.0
  %917 = vmatmul.mubr.f32.gmra.mrb[0].mxu0 %v601
  %v918 = vpop.f32.mrb[0].mxu0
  %v919 = vadd.f32 0.0, %v918
  %v920 = vpop.f32.mrb[0].mxu0
  %921 = vmatprep.mubr.f32.mxu0 0.0
  %922 = vmatmul.mubr.f32.gmra.mrb[0].mxu0 %v604
  %v923 = vpop.f32.mrb[0].mxu0
  %v924 = vadd.f32 0.0, %v923
  %v925 = vpop.f32.mrb[0].mxu0
  %926 = vmatprep.mubr.f32.mxu0 0.0
  %927 = vmatmul.mubr.f32.gmra.mrb[0].mxu0 %v607
  %v928 = vpop.f32.mrb[0].mxu0
  %v929 = vadd.f32 0.0, %v928
  %v930 = vpop.f32.mrb[0].mxu0
  %931 = vmatprep.mubr.f32.mxu0 0.0
  %932 = vmatmul.mubr.f32.gmra.mrb[0].mxu0 %v610
  %v933 = vpop.f32.mrb[0].mxu0
  %v934 = vadd.f32 0.0, %v933
  %v935 = vpop.f32.mrb[0].mxu0
  %936 = vmatprep.mubr.f32.mxu0 0.0
  %937 = vmatmul.mubr.f32.gmra.mrb[0].mxu0 %v613
  %v938 = vpop.f32.mrb[0].mxu0
  %v939 = vadd.f32 0.0, %v938
  %v940 = vpop.f32.mrb[0].mxu0
  %941 = vmatprep.mubr.f32.mxu0 0.0
  %942 = vmatmul.mubr.f32.gmra.mrb[0].mxu0 %v616
  %v943 = vpop.f32.mrb[0].mxu0
  %v944 = vadd.f32 0.0, %v943
  %v945 = vpop.f32.mrb[0].mxu0
  %946 = vmatprep.mubr.f32.mxu0 0.0
  %947 = vmatmul.mubr.f32.gmra.mrb[0].mxu0 %v619
  %v948 = vpop.f32.mrb[0].mxu0
  %v949 = vadd.f32 0.0, %v948
  %v950 = vpop.f32.mrb[0].mxu0
  %951 = vmatprep.mubr.f32.mxu0 0.0
  %952 = vmatmul.mubr.f32.gmra.mrb[0].mxu0 %v622
  %v953 = vpop.f32.mrb[0].mxu0
  %v954 = vadd.f32 0.0, %v953
  %v955 = vpop.f32.mrb[0].mxu0
  %956 = vmatprep.mubr.f32.mxu0 0.0
  %957 = vmatmul.mubr.f32.gmra.mrb[0].mxu0 %v625
  %v958 = vpop.f32.mrb[0].mxu0
  %v959 = vadd.f32 0.0, %v958
  %v960 = vpop.f32.mrb[0].mxu0
  %961 = vmatprep.mubr.f32.mxu0 0.0
  %962 = vmatmul.mubr.f32.gmra.mrb[0].mxu0 %v628
  %v963 = vpop.f32.mrb[0].mxu0
  %v964 = vadd.f32 0.0, %v963
  %v965 = vpop.f32.mrb[0].mxu0
  %966 = vmatprep.mubr.f32.mxu0 0.0
  %967 = vmatmul.mubr.f32.gmra.mrb[0].mxu0 %v631
  %v968 = vpop.f32.mrb[0].mxu0
  %v969 = vadd.f32 0.0, %v968
  %v970 = vpop.f32.mrb[0].mxu0
  %971 = vmatprep.mubr.f32.mxu0 0.0
  %972 = vmatmul.mubr.f32.gmra.mrb[0].mxu0 %v634
  %v973 = vpop.f32.mrb[0].mxu0
  %v974 = vadd.f32 0.0, %v973
  %v975 = vpop.f32.mrb[0].mxu0
  %976 = vmatprep.mubr.f32.mxu0 0.0
  %977 = vmatmul.mubr.f32.gmra.mrb[0].mxu0 %v637
  %v978 = vpop.f32.mrb[0].mxu0
  %v979 = vadd.f32 0.0, %v978
  %v980 = vpop.f32.mrb[0].mxu0
  %981 = vmatprep.mubr.f32.mxu0 0.0
  %982 = vmatmul.mubr.f32.gmra.mrb[0].mxu0 %v640
  %v983 = vpop.f32.mrb[0].mxu0
  %v984 = vadd.f32 0.0, %v983
  %v985 = vpop.f32.mrb[0].mxu0
  %986 = vmatprep.mubr.f32.mxu0 0.0
  %987 = vmatmul.mubr.f32.gmra.mrb[0].mxu0 %v643
  %v988 = vpop.f32.mrb[0].mxu0
  %v989 = vadd.f32 0.0, %v988
  %v990 = vpop.f32.mrb[0].mxu0
  %991 = vmatprep.mubr.f32.mxu0 0.0
  %992 = vmatmul.mubr.f32.gmra.mrb[0].mxu0 %v646
  %v993 = vpop.f32.mrb[0].mxu0
  %v994 = vadd.f32 0.0, %v993
  %v995 = vpop.f32.mrb[0].mxu0
  %996 = vmatprep.mubr.f32.mxu0 0.0
  %997 = vmatmul.mubr.f32.gmra.mrb[0].mxu0 %v649
  %v998 = vpop.f32.mrb[0].mxu0
  %v999 = vadd.f32 0.0, %v998
  %v1000 = vpop.f32.mrb[0].mxu0
  %1001 = vmatprep.mubr.f32.mxu0 0.0
  %1002 = vmatmul.mubr.f32.gmra.mrb[0].mxu0 %v652
  %v1003 = vpop.f32.mrb[0].mxu0
  %v1004 = vadd.f32 0.0, %v1003
  %v1005 = vpop.f32.mrb[0].mxu0
  %1006 = vmatprep.mubr.f32.mxu0 0.0
  %1007 = vmatmul.mubr.f32.gmra.mrb[0].mxu0 %v655
  %v1008 = vpop.f32.mrb[0].mxu0
  %v1009 = vadd.f32 0.0, %v1008
  %v1010 = vpop.f32.mrb[0].mxu0
  %1011 = vmatprep.mubr.f32.mxu0 0.0
  %1012 = vmatmul.mubr.f32.gmra.mrb[0].mxu0 %v658
  %v1013 = vpop.f32.mrb[0].mxu0
  %v1014 = vadd.f32 0.0, %v1013
  %v1015 = vpop.f32.mrb[0].mxu0
  %1016 = vmatprep.mubr.f32.mxu0 0.0
  %1017 = vmatmul.mubr.f32.gmra.mrb[0].mxu0 %v661
  %v1018 = vpop.f32.mrb[0].mxu0
  %v1019 = vadd.f32 0.0, %v1018
  %v1020 = vpop.f32.mrb[0].mxu0
  %1021 = vmatprep.mubr.f32.mxu0 0.0
  %1022 = vmatmul.mubr.f32.gmra.mrb[0].mxu0 %v664
  %v1023 = vpop.f32.mrb[0].mxu0
  %v1024 = vadd.f32 0.0, %v1023
  %v1025 = vpop.f32.mrb[0].mxu0
  %1026 = vmatprep.mubr.f32.mxu0 0.0
  %1027 = vmatmul.mubr.f32.gmra.mrb[0].mxu0 %v667
  %v1028 = vpop.f32.mrb[0].mxu0
  %v1029 = vadd.f32 0.0, %v1028
  %v1030 = vpop.f32.mrb[0].mxu0
  %1031 = vmatprep.mubr.f32.mxu0 0.0
  %1032 = vmatmul.mubr.f32.gmra.mrb[0].mxu0 %v670
  %v1033 = vpop.f32.mrb[0].mxu0
  %v1034 = vadd.f32 0.0, %v1033
  %v1035 = vpop.f32.mrb[0].mxu0
  %1036 = vmatprep.mubr.f32.mxu0 0.0
  %1037 = vmatmul.mubr.f32.gmra.mrb[0].mxu0 %v673
  %v1038 = vpop.f32.mrb[0].mxu0
  %v1039 = vadd.f32 0.0, %v1038
  %v1040 = vpop.f32.mrb[0].mxu0
  %1041 = vmatprep.mubr.f32.mxu0 0.0
  %1042 = vmatmul.mubr.f32.gmra.mrb[0].mxu0 %v676
  %v1043 = vpop.f32.mrb[0].mxu0
  %v1044 = vadd.f32 0.0, %v1043
  %v1045 = vpop.f32.mrb[0].mxu0
  %1046 = vmatprep.mubr.f32.mxu0 0.0
  %1047 = vmatmul.mubr.f32.gmra.mrb[0].mxu0 %v679
  %v1048 = vpop.f32.mrb[0].mxu0
  %v1049 = vadd.f32 0.0, %v1048
  %v1050 = vpop.f32.mrb[0].mxu0
  %1051 = vmatprep.mubr.f32.mxu0 0.0
  %1052 = vmatmul.mubr.f32.gmra.mrb[0].mxu0 %v682
  %v1053 = vpop.f32.mrb[0].mxu0
  %v1054 = vadd.f32 0.0, %v1053
  %v1055 = vpop.f32.mrb[0].mxu0
  %1056 = vmatprep.mubr.f32.mxu0 0.0
  %1057 = vmatmul.mubr.f32.gmra.mrb[0].mxu0 %v685
  %v1058 = vpop.f32.mrb[0].mxu0
  %v1059 = vadd.f32 0.0, %v1058
  %v1060 = vpop.f32.mrb[0].mxu0
  %1061 = vmatprep.mubr.f32.mxu0 0.0
  %1062 = vmatmul.mubr.f32.gmra.mrb[0].mxu0 %v688
  %v1063 = vpop.f32.mrb[0].mxu0
  %v1064 = vadd.f32 0.0, %v1063
  %v1065 = vpop.f32.mrb[0].mxu0
  %1066 = vmatprep.mubr.f32.mxu0 0.0
  %1067 = vmatmul.mubr.f32.gmra.mrb[0].mxu0 %v691
  %v1068 = vpop.f32.mrb[0].mxu0
  %v1069 = vadd.f32 0.0, %v1068
  %v1070 = vpop.f32.mrb[0].mxu0
  %1071 = vmatprep.mubr.f32.mxu0 0.0
  %1072 = vmatmul.mubr.f32.gmra.mrb[0].mxu0 %v694
  %v1073 = vpop.f32.mrb[0].mxu0
  %v1074 = vadd.f32 0.0, %v1073
  %v1075 = vpop.f32.mrb[0].mxu0
  %1076 = vmatprep.mubr.f32.mxu0 0.0
  %1077 = vmatmul.mubr.f32.gmra.mrb[0].mxu0 %v697
  %v1078 = vpop.f32.mrb[0].mxu0
  %v1079 = vadd.f32 0.0, %v1078
  %v1080 = vpop.f32.mrb[0].mxu0
  %1081 = vmatprep.mubr.f32.mxu0 0.0
  %1082 = vmatmul.mubr.f32.gmra.mrb[0].mxu0 %v700
  %v1083 = vpop.f32.mrb[0].mxu0
  %v1084 = vadd.f32 0.0, %v1083
  %v1085 = vpop.f32.mrb[0].mxu0
  %1086 = vdwg.mxu0
  %1087 = vrot.lane.b32.xlu0 %v438, 112
  %v1088 = vpop.permute.xlu0 %1087
  %1089 = vrot.lane.b32.xlu0 %v439, 112
  %v1090 = vpop.permute.xlu0 %1089
  %1091 = vrot.lane.b32.xlu0 %v440, 112
  %v1092 = vpop.permute.xlu0 %1091
  %1093 = vrot.lane.b32.xlu0 %v441, 112
  %v1094 = vpop.permute.xlu0 %1093
  %1095 = vrot.lane.b32.xlu0 %v442, 112
  %v1096 = vpop.permute.xlu0 %1095
  %1097 = vrot.lane.b32.xlu0 %v443, 112
  %v1098 = vpop.permute.xlu0 %1097
  %1099 = vrot.lane.b32.xlu0 %v444, 112
  %v1100 = vpop.permute.xlu0 %1099
  %1101 = vrot.lane.b32.xlu0 %v445, 112
  %v1102 = vpop.permute.xlu0 %1101
  %1103 = vrot.lane.b32.xlu0 %v446, 112
  %v1104 = vpop.permute.xlu0 %1103
  %1105 = vrot.lane.b32.xlu0 %v447, 112
  %v1106 = vpop.permute.xlu0 %1105
  %1107 = vrot.lane.b32.xlu0 %v448, 112
  %v1108 = vpop.permute.xlu0 %1107
  %1109 = vrot.lane.b32.xlu0 %v449, 112
  %v1110 = vpop.permute.xlu0 %1109
  %1111 = vrot.lane.b32.xlu0 %v450, 112
  %v1112 = vpop.permute.xlu0 %1111
  %1113 = vrot.lane.b32.xlu0 %v451, 112
  %v1114 = vpop.permute.xlu0 %1113
  %1115 = vrot.lane.b32.xlu0 %v452, 112
  %v1116 = vpop.permute.xlu0 %1115
  %1117 = vrot.lane.b32.xlu0 %v453, 112
  %v1118 = vpop.permute.xlu0 %1117
  %1119 = vrot.lane.b32.xlu0 %v454, 112
  %v1120 = vpop.permute.xlu0 %1119
  %1121 = vrot.lane.b32.xlu0 %v455, 112
  %v1122 = vpop.permute.xlu0 %1121
  %1123 = vrot.lane.b32.xlu0 %v456, 112
  %v1124 = vpop.permute.xlu0 %1123
  %1125 = vrot.lane.b32.xlu0 %v457, 112
  %v1126 = vpop.permute.xlu0 %1125
  %1127 = vrot.lane.b32.xlu0 %v458, 112
  %v1128 = vpop.permute.xlu0 %1127
  %1129 = vrot.lane.b32.xlu0 %v459, 112
  %v1130 = vpop.permute.xlu0 %1129
  %1131 = vrot.lane.b32.xlu0 %v460, 112
  %v1132 = vpop.permute.xlu0 %1131
  %1133 = vrot.lane.b32.xlu0 %v461, 112
  %v1134 = vpop.permute.xlu0 %1133
  %1135 = vrot.lane.b32.xlu0 %v462, 112
  %v1136 = vpop.permute.xlu0 %1135
  %1137 = vrot.lane.b32.xlu0 %v463, 112
  %v1138 = vpop.permute.xlu0 %1137
  %1139 = vrot.lane.b32.xlu0 %v464, 112
  %v1140 = vpop.permute.xlu0 %1139
  %1141 = vrot.lane.b32.xlu0 %v465, 112
  %v1142 = vpop.permute.xlu0 %1141
  %1143 = vrot.lane.b32.xlu0 %v466, 112
  %v1144 = vpop.permute.xlu0 %1143
  %1145 = vrot.lane.b32.xlu0 %v467, 112
  %v1146 = vpop.permute.xlu0 %1145
  %1147 = vrot.lane.b32.xlu0 %v468, 112
  %v1148 = vpop.permute.xlu0 %1147
  %1149 = vrot.lane.b32.xlu0 %v469, 112
  %v1150 = vpop.permute.xlu0 %1149
  %1151 = vrot.lane.b32.xlu0 %v470, 112
  %v1152 = vpop.permute.xlu0 %1151
  %1153 = vrot.lane.b32.xlu0 %v471, 112
  %v1154 = vpop.permute.xlu0 %1153
  %1155 = vrot.lane.b32.xlu0 %v472, 112
  %v1156 = vpop.permute.xlu0 %1155
  %1157 = vrot.lane.b32.xlu0 %v473, 112
  %v1158 = vpop.permute.xlu0 %1157
  %1159 = vrot.lane.b32.xlu0 %v474, 112
  %v1160 = vpop.permute.xlu0 %1159
  %1161 = vrot.lane.b32.xlu0 %v475, 112
  %v1162 = vpop.permute.xlu0 %1161
  %1163 = vrot.lane.b32.xlu0 %v476, 112
  %v1164 = vpop.permute.xlu0 %1163
  %1165 = vrot.lane.b32.xlu0 %v477, 112
  %v1166 = vpop.permute.xlu0 %1165
  %1167 = vrot.lane.b32.xlu0 %v478, 112
  %v1168 = vpop.permute.xlu0 %1167
  %1169 = vrot.lane.b32.xlu0 %v479, 112
  %v1170 = vpop.permute.xlu0 %1169
  %1171 = vrot.lane.b32.xlu0 %v480, 112
  %v1172 = vpop.permute.xlu0 %1171
  %1173 = vrot.lane.b32.xlu0 %v481, 112
  %v1174 = vpop.permute.xlu0 %1173
  %1175 = vrot.lane.b32.xlu0 %v482, 112
  %v1176 = vpop.permute.xlu0 %1175
  %1177 = vrot.lane.b32.xlu0 %v483, 112
  %v1178 = vpop.permute.xlu0 %1177
  %1179 = vrot.lane.b32.xlu0 %v484, 112
  %v1180 = vpop.permute.xlu0 %1179
  %1181 = vrot.lane.b32.xlu0 %v485, 112
  %v1182 = vpop.permute.xlu0 %1181
  %1183 = vrot.lane.b32.xlu0 %v486, 112
  %v1184 = vpop.permute.xlu0 %1183
  %1185 = vrot.lane.b32.xlu0 %v487, 112
  %v1186 = vpop.permute.xlu0 %1185
  %1187 = vrot.lane.b32.xlu0 %v488, 112
  %v1188 = vpop.permute.xlu0 %1187
  %1189 = vrot.lane.b32.xlu0 %v489, 112
  %v1190 = vpop.permute.xlu0 %1189
  %1191 = vrot.lane.b32.xlu0 %v490, 112
  %v1192 = vpop.permute.xlu0 %1191
  %1193 = vrot.lane.b32.xlu0 %v491, 112
  %v1194 = vpop.permute.xlu0 %1193
  %1195 = vrot.lane.b32.xlu0 %v492, 112
  %v1196 = vpop.permute.xlu0 %1195
  %1197 = vrot.lane.b32.xlu0 %v493, 112
  %v1198 = vpop.permute.xlu0 %1197
  %1199 = vrot.lane.b32.xlu0 %v494, 112
  %v1200 = vpop.permute.xlu0 %1199
  %1201 = vrot.lane.b32.xlu0 %v495, 112
  %v1202 = vpop.permute.xlu0 %1201
  %1203 = vrot.lane.b32.xlu0 %v496, 112
  %v1204 = vpop.permute.xlu0 %1203
  %1205 = vrot.lane.b32.xlu0 %v497, 112
  %v1206 = vpop.permute.xlu0 %1205
  %1207 = vrot.lane.b32.xlu0 %v498, 112
  %v1208 = vpop.permute.xlu0 %1207
  %1209 = vrot.lane.b32.xlu0 %v499, 112
  %v1210 = vpop.permute.xlu0 %1209
  %1211 = vrot.lane.b32.xlu0 %v500, 112
  %v1212 = vpop.permute.xlu0 %1211
  %1213 = vrot.lane.b32.xlu0 %v501, 112
  %v1214 = vpop.permute.xlu0 %1213
  %v1279 = vmul.f32 %v769, %v1088
  %v1280 = vmul.f32 %v774, %v1090
  %v1281 = vmul.f32 %v779, %v1092
  %v1282 = vmul.f32 %v784, %v1094
  %v1283 = vmul.f32 %v789, %v1096
  %v1284 = vmul.f32 %v794, %v1098
  %v1285 = vmul.f32 %v799, %v1100
  %v1286 = vmul.f32 %v804, %v1102
  %v1287 = vmul.f32 %v809, %v1104
  %v1288 = vmul.f32 %v814, %v1106
  %v1289 = vmul.f32 %v819, %v1108
  %v1290 = vmul.f32 %v824, %v1110
  %v1291 = vmul.f32 %v829, %v1112
  %v1292 = vmul.f32 %v834, %v1114
  %v1293 = vmul.f32 %v839, %v1116
  %v1294 = vmul.f32 %v844, %v1118
  %v1295 = vmul.f32 %v849, %v1120
  %v1296 = vmul.f32 %v854, %v1122
  %v1297 = vmul.f32 %v859, %v1124
  %v1298 = vmul.f32 %v864, %v1126
  %v1299 = vmul.f32 %v869, %v1128
  %v1300 = vmul.f32 %v874, %v1130
  %v1301 = vmul.f32 %v879, %v1132
  %v1302 = vmul.f32 %v884, %v1134
  %v1303 = vmul.f32 %v889, %v1136
  %v1304 = vmul.f32 %v894, %v1138
  %v1305 = vmul.f32 %v899, %v1140
  %v1306 = vmul.f32 %v904, %v1142
  %v1307 = vmul.f32 %v909, %v1144
  %v1308 = vmul.f32 %v914, %v1146
  %v1309 = vmul.f32 %v919, %v1148
  %v1310 = vmul.f32 %v924, %v1150
  %v1311 = vmul.f32 %v929, %v1152
  %v1312 = vmul.f32 %v934, %v1154
  %v1313 = vmul.f32 %v939, %v1156
  %v1314 = vmul.f32 %v944, %v1158
  %v1315 = vmul.f32 %v949, %v1160
  %v1316 = vmul.f32 %v954, %v1162
  %v1317 = vmul.f32 %v959, %v1164
  %v1318 = vmul.f32 %v964, %v1166
  %v1319 = vmul.f32 %v969, %v1168
  %v1320 = vmul.f32 %v974, %v1170
  %v1321 = vmul.f32 %v979, %v1172
  %v1322 = vmul.f32 %v984, %v1174
  %v1323 = vmul.f32 %v989, %v1176
  %v1324 = vmul.f32 %v994, %v1178
  %v1325 = vmul.f32 %v999, %v1180
  %v1326 = vmul.f32 %v1004, %v1182
  %v1327 = vmul.f32 %v1009, %v1184
  %v1328 = vmul.f32 %v1014, %v1186
  %v1329 = vmul.f32 %v1019, %v1188
  %v1330 = vmul.f32 %v1024, %v1190
  %v1331 = vmul.f32 %v1029, %v1192
  %v1332 = vmul.f32 %v1034, %v1194
  %v1333 = vmul.f32 %v1039, %v1196
  %v1334 = vmul.f32 %v1044, %v1198
  %v1335 = vmul.f32 %v1049, %v1200
  %v1336 = vmul.f32 %v1054, %v1202
  %v1337 = vmul.f32 %v1059, %v1204
  %v1338 = vmul.f32 %v1064, %v1206
  %v1339 = vmul.f32 %v1069, %v1208
  %v1340 = vmul.f32 %v1074, %v1210
  %v1341 = vmul.f32 %v1079, %v1212
  %v1342 = vmul.f32 %v1084, %v1214
  %vm1343 = vcmask 261120
  %v1345 = vsel %vm1343, %v435, 0
  %v1348 = vsel %vm1343, %v1279, 0
  %v1351 = vsel %vm1343, %v1280, 0
  %v1354 = vsel %vm1343, %v1281, 0
  %v1357 = vsel %vm1343, %v1282, 0
  %v1360 = vsel %vm1343, %v1283, 0
  %v1363 = vsel %vm1343, %v1284, 0
  %v1366 = vsel %vm1343, %v1285, 0
  %v1369 = vsel %vm1343, %v1286, 0
  %v1372 = vsel %vm1343, %v1287, 0
  %v1375 = vsel %vm1343, %v1288, 0
  %v1378 = vsel %vm1343, %v1289, 0
  %v1381 = vsel %vm1343, %v1290, 0
  %v1384 = vsel %vm1343, %v1291, 0
  %v1387 = vsel %vm1343, %v1292, 0
  %v1390 = vsel %vm1343, %v1293, 0
  %v1393 = vsel %vm1343, %v1294, 0
  %v1396 = vsel %vm1343, %v1295, 0
  %v1399 = vsel %vm1343, %v1296, 0
  %v1402 = vsel %vm1343, %v1297, 0
  %v1405 = vsel %vm1343, %v1298, 0
  %v1408 = vsel %vm1343, %v1299, 0
  %v1411 = vsel %vm1343, %v1300, 0
  %v1414 = vsel %vm1343, %v1301, 0
  %v1417 = vsel %vm1343, %v1302, 0
  %v1420 = vsel %vm1343, %v1303, 0
  %v1423 = vsel %vm1343, %v1304, 0
  %v1426 = vsel %vm1343, %v1305, 0
  %v1429 = vsel %vm1343, %v1306, 0
  %v1432 = vsel %vm1343, %v1307, 0
  %v1435 = vsel %vm1343, %v1308, 0
  %v1438 = vsel %vm1343, %v1309, 0
  %v1441 = vsel %vm1343, %v1310, 0
  %v1444 = vsel %vm1343, %v1311, 0
  %v1447 = vsel %vm1343, %v1312, 0
  %v1450 = vsel %vm1343, %v1313, 0
  %v1453 = vsel %vm1343, %v1314, 0
  %v1456 = vsel %vm1343, %v1315, 0
  %v1459 = vsel %vm1343, %v1316, 0
  %v1462 = vsel %vm1343, %v1317, 0
  %v1465 = vsel %vm1343, %v1318, 0
  %v1468 = vsel %vm1343, %v1319, 0
  %v1471 = vsel %vm1343, %v1320, 0
  %v1474 = vsel %vm1343, %v1321, 0
  %v1477 = vsel %vm1343, %v1322, 0
  %v1480 = vsel %vm1343, %v1323, 0
  %v1483 = vsel %vm1343, %v1324, 0
  %v1486 = vsel %vm1343, %v1325, 0
  %v1489 = vsel %vm1343, %v1326, 0
  %v1492 = vsel %vm1343, %v1327, 0
  %v1495 = vsel %vm1343, %v1328, 0
  %v1498 = vsel %vm1343, %v1329, 0
  %v1501 = vsel %vm1343, %v1330, 0
  %v1504 = vsel %vm1343, %v1331, 0
  %v1507 = vsel %vm1343, %v1332, 0
  %v1510 = vsel %vm1343, %v1333, 0
  %v1513 = vsel %vm1343, %v1334, 0
  %v1516 = vsel %vm1343, %v1335, 0
  %v1519 = vsel %vm1343, %v1336, 0
  %v1522 = vsel %vm1343, %v1337, 0
  %v1525 = vsel %vm1343, %v1338, 0
  %v1528 = vsel %vm1343, %v1339, 0
  %v1531 = vsel %vm1343, %v1340, 0
  %v1534 = vsel %vm1343, %v1341, 0
  %v1537 = vsel %vm1343, %v1342, 0
  %1539 = vmatprep.subr.mxu0 0.0
  %1540 = vmatpush1.xpose.msra.mxu0 %v1348
  %1541 = vmatprep.subr.mxu0 0.0
  %1542 = vmatpush1.xpose.msra.mxu0 %v1351
  %1543 = vmatprep.subr.mxu0 0.0
  %1544 = vmatpush1.xpose.msra.mxu0 %v1354
  %1545 = vmatprep.subr.mxu0 0.0
  %1546 = vmatpush1.xpose.msra.mxu0 %v1357
  %1547 = vmatprep.subr.mxu0 0.0
  %1548 = vmatpush1.xpose.msra.mxu0 %v1360
  %1549 = vmatprep.subr.mxu0 0.0
  %1550 = vmatpush1.xpose.msra.mxu0 %v1363
  %1551 = vmatprep.subr.mxu0 0.0
  %1552 = vmatpush1.xpose.msra.mxu0 %v1366
  %1553 = vmatprep.subr.mxu0 0.0
  %1554 = vmatpush1.xpose.msra.mxu0 %v1369
  %1555 = vmatprep.subr.mxu0 0.0
  %1556 = vmatpush1.xpose.msra.mxu0 %v1372
  %1557 = vmatprep.subr.mxu0 0.0
  %1558 = vmatpush1.xpose.msra.mxu0 %v1375
  %1559 = vmatprep.subr.mxu0 0.0
  %1560 = vmatpush1.xpose.msra.mxu0 %v1378
  %1561 = vmatprep.subr.mxu0 0.0
  %1562 = vmatpush1.xpose.msra.mxu0 %v1381
  %1563 = vmatprep.subr.mxu0 0.0
  %1564 = vmatpush1.xpose.msra.mxu0 %v1384
  %1565 = vmatprep.subr.mxu0 0.0
  %1566 = vmatpush1.xpose.msra.mxu0 %v1387
  %1567 = vmatprep.subr.mxu0 0.0
  %1568 = vmatpush1.xpose.msra.mxu0 %v1390
  %1569 = vmatprep.subr.mxu0 0.0
  %1570 = vmatpush1.xpose.msra.mxu0 %v1393
  %1571 = vmatprep.subr.mxu0 0.0
  %1572 = vmatpush1.xpose.msra.mxu0 %v1396
  %1573 = vmatprep.subr.mxu0 0.0
  %1574 = vmatpush1.xpose.msra.mxu0 %v1399
  %1575 = vmatprep.subr.mxu0 0.0
  %1576 = vmatpush1.xpose.msra.mxu0 %v1402
  %1577 = vmatprep.subr.mxu0 0.0
  %1578 = vmatpush1.xpose.msra.mxu0 %v1405
  %1579 = vmatprep.subr.mxu0 0.0
  %1580 = vmatpush1.xpose.msra.mxu0 %v1408
  %1581 = vmatprep.subr.mxu0 0.0
  %1582 = vmatpush1.xpose.msra.mxu0 %v1411
  %1583 = vmatprep.subr.mxu0 0.0
  %1584 = vmatpush1.xpose.msra.mxu0 %v1414
  %1585 = vmatprep.subr.mxu0 0.0
  %1586 = vmatpush1.xpose.msra.mxu0 %v1417
  %1587 = vmatprep.subr.mxu0 0.0
  %1588 = vmatpush1.xpose.msra.mxu0 %v1420
  %1589 = vmatprep.subr.mxu0 0.0
  %1590 = vmatpush1.xpose.msra.mxu0 %v1423
  %1591 = vmatprep.subr.mxu0 0.0
  %1592 = vmatpush1.xpose.msra.mxu0 %v1426
  %1593 = vmatprep.subr.mxu0 0.0
  %1594 = vmatpush1.xpose.msra.mxu0 %v1429
  %1595 = vmatprep.subr.mxu0 0.0
  %1596 = vmatpush1.xpose.msra.mxu0 %v1432
  %1597 = vmatprep.subr.mxu0 0.0
  %1598 = vmatpush1.xpose.msra.mxu0 %v1435
  %1599 = vmatprep.subr.mxu0 0.0
  %1600 = vmatpush1.xpose.msra.mxu0 %v1438
  %1601 = vmatprep.subr.mxu0 0.0
  %1602 = vmatpush1.xpose.msra.mxu0 %v1441
  %1603 = vmatprep.mubr.f32.mxu0 0.0
  %1604 = vmatmul.mubr.f32.gmra.mrb[0].mxu0 %v1345
  %v1605 = vpop.f32.mrb[0].mxu0
  %v1606 = vadd.f32 0.0, %v1605
  %v1607 = vpop.f32.mrb[0].mxu0
  %v1608 = vadd.f32 0.0, %v1607
  %1609 = vdwg.mxu0
  %1610 = vmatprep.subr.mxu0 0.0
  %1611 = vmatpush1.xpose.msra.mxu0 %v1444
  %1612 = vmatprep.subr.mxu0 0.0
  %1613 = vmatpush1.xpose.msra.mxu0 %v1447
  %1614 = vmatprep.subr.mxu0 0.0
  %1615 = vmatpush1.xpose.msra.mxu0 %v1450
  %1616 = vmatprep.subr.mxu0 0.0
  %1617 = vmatpush1.xpose.msra.mxu0 %v1453
  %1618 = vmatprep.subr.mxu0 0.0
  %1619 = vmatpush1.xpose.msra.mxu0 %v1456
  %1620 = vmatprep.subr.mxu0 0.0
  %1621 = vmatpush1.xpose.msra.mxu0 %v1459
  %1622 = vmatprep.subr.mxu0 0.0
  %1623 = vmatpush1.xpose.msra.mxu0 %v1462
  %1624 = vmatprep.subr.mxu0 0.0
  %1625 = vmatpush1.xpose.msra.mxu0 %v1465
  %1626 = vmatprep.subr.mxu0 0.0
  %1627 = vmatpush1.xpose.msra.mxu0 %v1468
  %1628 = vmatprep.subr.mxu0 0.0
  %1629 = vmatpush1.xpose.msra.mxu0 %v1471
  %1630 = vmatprep.subr.mxu0 0.0
  %1631 = vmatpush1.xpose.msra.mxu0 %v1474
  %1632 = vmatprep.subr.mxu0 0.0
  %1633 = vmatpush1.xpose.msra.mxu0 %v1477
  %1634 = vmatprep.subr.mxu0 0.0
  %1635 = vmatpush1.xpose.msra.mxu0 %v1480
  %1636 = vmatprep.subr.mxu0 0.0
  %1637 = vmatpush1.xpose.msra.mxu0 %v1483
  %1638 = vmatprep.subr.mxu0 0.0
  %1639 = vmatpush1.xpose.msra.mxu0 %v1486
  %1640 = vmatprep.subr.mxu0 0.0
  %1641 = vmatpush1.xpose.msra.mxu0 %v1489
  %1642 = vmatprep.subr.mxu0 0.0
  %1643 = vmatpush1.xpose.msra.mxu0 %v1492
  %1644 = vmatprep.subr.mxu0 0.0
  %1645 = vmatpush1.xpose.msra.mxu0 %v1495
  %1646 = vmatprep.subr.mxu0 0.0
  %1647 = vmatpush1.xpose.msra.mxu0 %v1498
  %1648 = vmatprep.subr.mxu0 0.0
  %1649 = vmatpush1.xpose.msra.mxu0 %v1501
  %1650 = vmatprep.subr.mxu0 0.0
  %1651 = vmatpush1.xpose.msra.mxu0 %v1504
  %1652 = vmatprep.subr.mxu0 0.0
  %1653 = vmatpush1.xpose.msra.mxu0 %v1507
  %1654 = vmatprep.subr.mxu0 0.0
  %1655 = vmatpush1.xpose.msra.mxu0 %v1510
  %1656 = vmatprep.subr.mxu0 0.0
  %1657 = vmatpush1.xpose.msra.mxu0 %v1513
  %1658 = vmatprep.subr.mxu0 0.0
  %1659 = vmatpush1.xpose.msra.mxu0 %v1516
  %1660 = vmatprep.subr.mxu0 0.0
  %1661 = vmatpush1.xpose.msra.mxu0 %v1519
  %1662 = vmatprep.subr.mxu0 0.0
  %1663 = vmatpush1.xpose.msra.mxu0 %v1522
  %1664 = vmatprep.subr.mxu0 0.0
  %1665 = vmatpush1.xpose.msra.mxu0 %v1525
  %1666 = vmatprep.subr.mxu0 0.0
  %1667 = vmatpush1.xpose.msra.mxu0 %v1528
  %1668 = vmatprep.subr.mxu0 0.0
  %1669 = vmatpush1.xpose.msra.mxu0 %v1531
  %1670 = vmatprep.subr.mxu0 0.0
  %1671 = vmatpush1.xpose.msra.mxu0 %v1534
  %1672 = vmatprep.subr.mxu0 0.0
  %1673 = vmatpush1.xpose.msra.mxu0 %v1537
  %1674 = vmatprep.mubr.f32.mxu0 0.0
  %1675 = vmatmul.mubr.f32.gmra.mrb[0].mxu0 %v1345
  %v1676 = vpop.f32.mrb[0].mxu0
  %v1677 = vadd.f32 0.0, %v1676
  %v1678 = vpop.f32.mrb[0].mxu0
  %v1679 = vadd.f32 0.0, %v1678
  %1680 = vdwg.mxu0
  %v1681 = vmax.f32 %v1606, -60.0
  %v1682 = vmax.f32 %v1608, -60.0
  %v1683 = vmax.f32 %v1677, -60.0
  %v1684 = vmax.f32 %v1679, -60.0
  %v1685 = vmin.f32 %v1681, 60.0
  %v1686 = vmin.f32 %v1682, 60.0
  %v1687 = vmin.f32 %v1683, 60.0
  %v1688 = vmin.f32 %v1684, 60.0
  %v1689 = vmul.f32 %v1685, 1.442695
  %v1690 = vpow.pop %v1689
  %v1691 = vmul.f32 %v1686, 1.442695
  %v1692 = vpow.pop %v1691
  %v1693 = vmul.f32 %v1687, 1.442695
  %v1694 = vpow.pop %v1693
  %v1695 = vmul.f32 %v1688, 1.442695
  %v1696 = vpow.pop %v1695
  %1697 = vrot.lane.b32.xlu0 %v1279, 96
  %v1698 = vpop.permute.xlu0 %1697
  %1699 = vrot.lane.b32.xlu0 %v1280, 96
  %v1700 = vpop.permute.xlu0 %1699
  %1701 = vrot.lane.b32.xlu0 %v1281, 96
  %v1702 = vpop.permute.xlu0 %1701
  %1703 = vrot.lane.b32.xlu0 %v1282, 96
  %v1704 = vpop.permute.xlu0 %1703
  %1705 = vrot.lane.b32.xlu0 %v1283, 96
  %v1706 = vpop.permute.xlu0 %1705
  %1707 = vrot.lane.b32.xlu0 %v1284, 96
  %v1708 = vpop.permute.xlu0 %1707
  %1709 = vrot.lane.b32.xlu0 %v1285, 96
  %v1710 = vpop.permute.xlu0 %1709
  %1711 = vrot.lane.b32.xlu0 %v1286, 96
  %v1712 = vpop.permute.xlu0 %1711
  %1713 = vrot.lane.b32.xlu0 %v1287, 96
  %v1714 = vpop.permute.xlu0 %1713
  %1715 = vrot.lane.b32.xlu0 %v1288, 96
  %v1716 = vpop.permute.xlu0 %1715
  %1717 = vrot.lane.b32.xlu0 %v1289, 96
  %v1718 = vpop.permute.xlu0 %1717
  %1719 = vrot.lane.b32.xlu0 %v1290, 96
  %v1720 = vpop.permute.xlu0 %1719
  %1721 = vrot.lane.b32.xlu0 %v1291, 96
  %v1722 = vpop.permute.xlu0 %1721
  %1723 = vrot.lane.b32.xlu0 %v1292, 96
  %v1724 = vpop.permute.xlu0 %1723
  %1725 = vrot.lane.b32.xlu0 %v1293, 96
  %v1726 = vpop.permute.xlu0 %1725
  %1727 = vrot.lane.b32.xlu0 %v1294, 96
  %v1728 = vpop.permute.xlu0 %1727
  %1729 = vrot.lane.b32.xlu0 %v1295, 96
  %v1730 = vpop.permute.xlu0 %1729
  %1731 = vrot.lane.b32.xlu0 %v1296, 96
  %v1732 = vpop.permute.xlu0 %1731
  %1733 = vrot.lane.b32.xlu0 %v1297, 96
  %v1734 = vpop.permute.xlu0 %1733
  %1735 = vrot.lane.b32.xlu0 %v1298, 96
  %v1736 = vpop.permute.xlu0 %1735
  %1737 = vrot.lane.b32.xlu0 %v1299, 96
  %v1738 = vpop.permute.xlu0 %1737
  %1739 = vrot.lane.b32.xlu0 %v1300, 96
  %v1740 = vpop.permute.xlu0 %1739
  %1741 = vrot.lane.b32.xlu0 %v1301, 96
  %v1742 = vpop.permute.xlu0 %1741
  %1743 = vrot.lane.b32.xlu0 %v1302, 96
  %v1744 = vpop.permute.xlu0 %1743
  %1745 = vrot.lane.b32.xlu0 %v1303, 96
  %v1746 = vpop.permute.xlu0 %1745
  %1747 = vrot.lane.b32.xlu0 %v1304, 96
  %v1748 = vpop.permute.xlu0 %1747
  %1749 = vrot.lane.b32.xlu0 %v1305, 96
  %v1750 = vpop.permute.xlu0 %1749
  %1751 = vrot.lane.b32.xlu0 %v1306, 96
  %v1752 = vpop.permute.xlu0 %1751
  %1753 = vrot.lane.b32.xlu0 %v1307, 96
  %v1754 = vpop.permute.xlu0 %1753
  %1755 = vrot.lane.b32.xlu0 %v1308, 96
  %v1756 = vpop.permute.xlu0 %1755
  %1757 = vrot.lane.b32.xlu0 %v1309, 96
  %v1758 = vpop.permute.xlu0 %1757
  %1759 = vrot.lane.b32.xlu0 %v1310, 96
  %v1760 = vpop.permute.xlu0 %1759
  %1761 = vrot.lane.b32.xlu0 %v1311, 96
  %v1762 = vpop.permute.xlu0 %1761
  %1763 = vrot.lane.b32.xlu0 %v1312, 96
  %v1764 = vpop.permute.xlu0 %1763
  %1765 = vrot.lane.b32.xlu0 %v1313, 96
  %v1766 = vpop.permute.xlu0 %1765
  %1767 = vrot.lane.b32.xlu0 %v1314, 96
  %v1768 = vpop.permute.xlu0 %1767
  %1769 = vrot.lane.b32.xlu0 %v1315, 96
  %v1770 = vpop.permute.xlu0 %1769
  %1771 = vrot.lane.b32.xlu0 %v1316, 96
  %v1772 = vpop.permute.xlu0 %1771
  %1773 = vrot.lane.b32.xlu0 %v1317, 96
  %v1774 = vpop.permute.xlu0 %1773
  %1775 = vrot.lane.b32.xlu0 %v1318, 96
  %v1776 = vpop.permute.xlu0 %1775
  %1777 = vrot.lane.b32.xlu0 %v1319, 96
  %v1778 = vpop.permute.xlu0 %1777
  %1779 = vrot.lane.b32.xlu0 %v1320, 96
  %v1780 = vpop.permute.xlu0 %1779
  %1781 = vrot.lane.b32.xlu0 %v1321, 96
  %v1782 = vpop.permute.xlu0 %1781
  %1783 = vrot.lane.b32.xlu0 %v1322, 96
  %v1784 = vpop.permute.xlu0 %1783
  %1785 = vrot.lane.b32.xlu0 %v1323, 96
  %v1786 = vpop.permute.xlu0 %1785
  %1787 = vrot.lane.b32.xlu0 %v1324, 96
  %v1788 = vpop.permute.xlu0 %1787
  %1789 = vrot.lane.b32.xlu0 %v1325, 96
  %v1790 = vpop.permute.xlu0 %1789
  %1791 = vrot.lane.b32.xlu0 %v1326, 96
  %v1792 = vpop.permute.xlu0 %1791
  %1793 = vrot.lane.b32.xlu0 %v1327, 96
  %v1794 = vpop.permute.xlu0 %1793
  %1795 = vrot.lane.b32.xlu0 %v1328, 96
  %v1796 = vpop.permute.xlu0 %1795
  %1797 = vrot.lane.b32.xlu0 %v1329, 96
  %v1798 = vpop.permute.xlu0 %1797
  %1799 = vrot.lane.b32.xlu0 %v1330, 96
  %v1800 = vpop.permute.xlu0 %1799
  %1801 = vrot.lane.b32.xlu0 %v1331, 96
  %v1802 = vpop.permute.xlu0 %1801
  %1803 = vrot.lane.b32.xlu0 %v1332, 96
  %v1804 = vpop.permute.xlu0 %1803
  %1805 = vrot.lane.b32.xlu0 %v1333, 96
  %v1806 = vpop.permute.xlu0 %1805
  %1807 = vrot.lane.b32.xlu0 %v1334, 96
  %v1808 = vpop.permute.xlu0 %1807
  %1809 = vrot.lane.b32.xlu0 %v1335, 96
  %v1810 = vpop.permute.xlu0 %1809
  %1811 = vrot.lane.b32.xlu0 %v1336, 96
  %v1812 = vpop.permute.xlu0 %1811
  %1813 = vrot.lane.b32.xlu0 %v1337, 96
  %v1814 = vpop.permute.xlu0 %1813
  %1815 = vrot.lane.b32.xlu0 %v1338, 96
  %v1816 = vpop.permute.xlu0 %1815
  %1817 = vrot.lane.b32.xlu0 %v1339, 96
  %v1818 = vpop.permute.xlu0 %1817
  %1819 = vrot.lane.b32.xlu0 %v1340, 96
  %v1820 = vpop.permute.xlu0 %1819
  %1821 = vrot.lane.b32.xlu0 %v1341, 96
  %v1822 = vpop.permute.xlu0 %1821
  %1823 = vrot.lane.b32.xlu0 %v1342, 96
  %v1824 = vpop.permute.xlu0 %1823
  %1889 = vmatprep.subr.mxu0 0.0
  %1890 = vmatpush1.msra.mxu0 %v1698
  %1891 = vmatprep.subr.mxu0 0.0
  %1892 = vmatpush1.msra.mxu0 %v1700
  %1893 = vmatprep.subr.mxu0 0.0
  %1894 = vmatpush1.msra.mxu0 %v1702
  %1895 = vmatprep.subr.mxu0 0.0
  %1896 = vmatpush1.msra.mxu0 %v1704
  %1897 = vmatprep.subr.mxu0 0.0
  %1898 = vmatpush1.msra.mxu0 %v1706
  %1899 = vmatprep.subr.mxu0 0.0
  %1900 = vmatpush1.msra.mxu0 %v1708
  %1901 = vmatprep.subr.mxu0 0.0
  %1902 = vmatpush1.msra.mxu0 %v1710
  %1903 = vmatprep.subr.mxu0 0.0
  %1904 = vmatpush1.msra.mxu0 %v1712
  %1905 = vmatprep.subr.mxu0 0.0
  %1906 = vmatpush1.msra.mxu0 %v1714
  %1907 = vmatprep.subr.mxu0 0.0
  %1908 = vmatpush1.msra.mxu0 %v1716
  %1909 = vmatprep.subr.mxu0 0.0
  %1910 = vmatpush1.msra.mxu0 %v1718
  %1911 = vmatprep.subr.mxu0 0.0
  %1912 = vmatpush1.msra.mxu0 %v1720
  %1913 = vmatprep.subr.mxu0 0.0
  %1914 = vmatpush1.msra.mxu0 %v1722
  %1915 = vmatprep.subr.mxu0 0.0
  %1916 = vmatpush1.msra.mxu0 %v1724
  %1917 = vmatprep.subr.mxu0 0.0
  %1918 = vmatpush1.msra.mxu0 %v1726
  %1919 = vmatprep.subr.mxu0 0.0
  %1920 = vmatpush1.msra.mxu0 %v1728
  %1921 = vmatprep.subr.mxu0 0.0
  %1922 = vmatpush1.msra.mxu0 %v1730
  %1923 = vmatprep.subr.mxu0 0.0
  %1924 = vmatpush1.msra.mxu0 %v1732
  %1925 = vmatprep.subr.mxu0 0.0
  %1926 = vmatpush1.msra.mxu0 %v1734
  %1927 = vmatprep.subr.mxu0 0.0
  %1928 = vmatpush1.msra.mxu0 %v1736
  %1929 = vmatprep.subr.mxu0 0.0
  %1930 = vmatpush1.msra.mxu0 %v1738
  %1931 = vmatprep.subr.mxu0 0.0
  %1932 = vmatpush1.msra.mxu0 %v1740
  %1933 = vmatprep.subr.mxu0 0.0
  %1934 = vmatpush1.msra.mxu0 %v1742
  %1935 = vmatprep.subr.mxu0 0.0
  %1936 = vmatpush1.msra.mxu0 %v1744
  %1937 = vmatprep.subr.mxu0 0.0
  %1938 = vmatpush1.msra.mxu0 %v1746
  %1939 = vmatprep.subr.mxu0 0.0
  %1940 = vmatpush1.msra.mxu0 %v1748
  %1941 = vmatprep.subr.mxu0 0.0
  %1942 = vmatpush1.msra.mxu0 %v1750
  %1943 = vmatprep.subr.mxu0 0.0
  %1944 = vmatpush1.msra.mxu0 %v1752
  %1945 = vmatprep.subr.mxu0 0.0
  %1946 = vmatpush1.msra.mxu0 %v1754
  %1947 = vmatprep.subr.mxu0 0.0
  %1948 = vmatpush1.msra.mxu0 %v1756
  %1949 = vmatprep.subr.mxu0 0.0
  %1950 = vmatpush1.msra.mxu0 %v1758
  %1951 = vmatprep.subr.mxu0 0.0
  %1952 = vmatpush1.msra.mxu0 %v1760
  %1953 = vmatprep.mubr.f32.mxu0 %v1692
  %1954 = vmatmul.mubr.f32.gmra.mrb[0].mxu0 %v1690
  %v1955 = vpop.f32.mrb[0].mxu0
  %v1956 = vadd.f32 0.0, %v1955
  %v1957 = vpop.f32.mrb[0].mxu0
  %1958 = vdwg.mxu0
  %1959 = vmatprep.subr.mxu0 0.0
  %1960 = vmatpush1.msra.mxu0 %v1762
  %1961 = vmatprep.subr.mxu0 0.0
  %1962 = vmatpush1.msra.mxu0 %v1764
  %1963 = vmatprep.subr.mxu0 0.0
  %1964 = vmatpush1.msra.mxu0 %v1766
  %1965 = vmatprep.subr.mxu0 0.0
  %1966 = vmatpush1.msra.mxu0 %v1768
  %1967 = vmatprep.subr.mxu0 0.0
  %1968 = vmatpush1.msra.mxu0 %v1770
  %1969 = vmatprep.subr.mxu0 0.0
  %1970 = vmatpush1.msra.mxu0 %v1772
  %1971 = vmatprep.subr.mxu0 0.0
  %1972 = vmatpush1.msra.mxu0 %v1774
  %1973 = vmatprep.subr.mxu0 0.0
  %1974 = vmatpush1.msra.mxu0 %v1776
  %1975 = vmatprep.subr.mxu0 0.0
  %1976 = vmatpush1.msra.mxu0 %v1778
  %1977 = vmatprep.subr.mxu0 0.0
  %1978 = vmatpush1.msra.mxu0 %v1780
  %1979 = vmatprep.subr.mxu0 0.0
  %1980 = vmatpush1.msra.mxu0 %v1782
  %1981 = vmatprep.subr.mxu0 0.0
  %1982 = vmatpush1.msra.mxu0 %v1784
  %1983 = vmatprep.subr.mxu0 0.0
  %1984 = vmatpush1.msra.mxu0 %v1786
  %1985 = vmatprep.subr.mxu0 0.0
  %1986 = vmatpush1.msra.mxu0 %v1788
  %1987 = vmatprep.subr.mxu0 0.0
  %1988 = vmatpush1.msra.mxu0 %v1790
  %1989 = vmatprep.subr.mxu0 0.0
  %1990 = vmatpush1.msra.mxu0 %v1792
  %1991 = vmatprep.subr.mxu0 0.0
  %1992 = vmatpush1.msra.mxu0 %v1794
  %1993 = vmatprep.subr.mxu0 0.0
  %1994 = vmatpush1.msra.mxu0 %v1796
  %1995 = vmatprep.subr.mxu0 0.0
  %1996 = vmatpush1.msra.mxu0 %v1798
  %1997 = vmatprep.subr.mxu0 0.0
  %1998 = vmatpush1.msra.mxu0 %v1800
  %1999 = vmatprep.subr.mxu0 0.0
  %2000 = vmatpush1.msra.mxu0 %v1802
  %2001 = vmatprep.subr.mxu0 0.0
  %2002 = vmatpush1.msra.mxu0 %v1804
  %2003 = vmatprep.subr.mxu0 0.0
  %2004 = vmatpush1.msra.mxu0 %v1806
  %2005 = vmatprep.subr.mxu0 0.0
  %2006 = vmatpush1.msra.mxu0 %v1808
  %2007 = vmatprep.subr.mxu0 0.0
  %2008 = vmatpush1.msra.mxu0 %v1810
  %2009 = vmatprep.subr.mxu0 0.0
  %2010 = vmatpush1.msra.mxu0 %v1812
  %2011 = vmatprep.subr.mxu0 0.0
  %2012 = vmatpush1.msra.mxu0 %v1814
  %2013 = vmatprep.subr.mxu0 0.0
  %2014 = vmatpush1.msra.mxu0 %v1816
  %2015 = vmatprep.subr.mxu0 0.0
  %2016 = vmatpush1.msra.mxu0 %v1818
  %2017 = vmatprep.subr.mxu0 0.0
  %2018 = vmatpush1.msra.mxu0 %v1820
  %2019 = vmatprep.subr.mxu0 0.0
  %2020 = vmatpush1.msra.mxu0 %v1822
  %2021 = vmatprep.subr.mxu0 0.0
  %2022 = vmatpush1.msra.mxu0 %v1824
  %2023 = vmatprep.mubr.f32.mxu0 %v1696
  %2024 = vmatmul.mubr.f32.gmra.mrb[0].mxu0 %v1694
  %v2025 = vpop.f32.mrb[0].mxu0
  %v2026 = vadd.f32 %v1956, %v2025
  %v2027 = vpop.f32.mrb[0].mxu0
  %2028 = vdwg.mxu0
  %2029 = vmatprep.subr.mxu0 0.0
  %2030 = vmatpush1.msra.mxu0 %v1088
  %2031 = vmatprep.subr.mxu0 0.0
  %2032 = vmatpush1.msra.mxu0 %v1090
  %2033 = vmatprep.subr.mxu0 0.0
  %2034 = vmatpush1.msra.mxu0 %v1092
  %2035 = vmatprep.subr.mxu0 0.0
  %2036 = vmatpush1.msra.mxu0 %v1094
  %2037 = vmatprep.subr.mxu0 0.0
  %2038 = vmatpush1.msra.mxu0 %v1096
  %2039 = vmatprep.subr.mxu0 0.0
  %2040 = vmatpush1.msra.mxu0 %v1098
  %2041 = vmatprep.subr.mxu0 0.0
  %2042 = vmatpush1.msra.mxu0 %v1100
  %2043 = vmatprep.subr.mxu0 0.0
  %2044 = vmatpush1.msra.mxu0 %v1102
  %2045 = vmatprep.subr.mxu0 0.0
  %2046 = vmatpush1.msra.mxu0 %v1104
  %2047 = vmatprep.subr.mxu0 0.0
  %2048 = vmatpush1.msra.mxu0 %v1106
  %2049 = vmatprep.subr.mxu0 0.0
  %2050 = vmatpush1.msra.mxu0 %v1108
  %2051 = vmatprep.subr.mxu0 0.0
  %2052 = vmatpush1.msra.mxu0 %v1110
  %2053 = vmatprep.subr.mxu0 0.0
  %2054 = vmatpush1.msra.mxu0 %v1112
  %2055 = vmatprep.subr.mxu0 0.0
  %2056 = vmatpush1.msra.mxu0 %v1114
  %2057 = vmatprep.subr.mxu0 0.0
  %2058 = vmatpush1.msra.mxu0 %v1116
  %2059 = vmatprep.subr.mxu0 0.0
  %2060 = vmatpush1.msra.mxu0 %v1118
  %2061 = vmatprep.subr.mxu0 0.0
  %2062 = vmatpush1.msra.mxu0 %v1120
  %2063 = vmatprep.subr.mxu0 0.0
  %2064 = vmatpush1.msra.mxu0 %v1122
  %2065 = vmatprep.subr.mxu0 0.0
  %2066 = vmatpush1.msra.mxu0 %v1124
  %2067 = vmatprep.subr.mxu0 0.0
  %2068 = vmatpush1.msra.mxu0 %v1126
  %2069 = vmatprep.subr.mxu0 0.0
  %2070 = vmatpush1.msra.mxu0 %v1128
  %2071 = vmatprep.subr.mxu0 0.0
  %2072 = vmatpush1.msra.mxu0 %v1130
  %2073 = vmatprep.subr.mxu0 0.0
  %2074 = vmatpush1.msra.mxu0 %v1132
  %2075 = vmatprep.subr.mxu0 0.0
  %2076 = vmatpush1.msra.mxu0 %v1134
  %2077 = vmatprep.subr.mxu0 0.0
  %2078 = vmatpush1.msra.mxu0 %v1136
  %2079 = vmatprep.subr.mxu0 0.0
  %2080 = vmatpush1.msra.mxu0 %v1138
  %2081 = vmatprep.subr.mxu0 0.0
  %2082 = vmatpush1.msra.mxu0 %v1140
  %2083 = vmatprep.subr.mxu0 0.0
  %2084 = vmatpush1.msra.mxu0 %v1142
  %2085 = vmatprep.subr.mxu0 0.0
  %2086 = vmatpush1.msra.mxu0 %v1144
  %2087 = vmatprep.subr.mxu0 0.0
  %2088 = vmatpush1.msra.mxu0 %v1146
  %2089 = vmatprep.subr.mxu0 0.0
  %2090 = vmatpush1.msra.mxu0 %v1148
  %2091 = vmatprep.subr.mxu0 0.0
  %2092 = vmatpush1.msra.mxu0 %v1150
  %2093 = vmatprep.mubr.f32.mxu0 %v1692
  %2094 = vmatmul.mubr.f32.gmra.mrb[0].mxu0 %v1690
  %v2095 = vpop.f32.mrb[0].mxu0
  %v2096 = vadd.f32 0.0, %v2095
  %v2097 = vpop.f32.mrb[0].mxu0
  %2098 = vdwg.mxu0
  %2099 = vmatprep.subr.mxu0 0.0
  %2100 = vmatpush1.msra.mxu0 %v1152
  %2101 = vmatprep.subr.mxu0 0.0
  %2102 = vmatpush1.msra.mxu0 %v1154
  %2103 = vmatprep.subr.mxu0 0.0
  %2104 = vmatpush1.msra.mxu0 %v1156
  %2105 = vmatprep.subr.mxu0 0.0
  %2106 = vmatpush1.msra.mxu0 %v1158
  %2107 = vmatprep.subr.mxu0 0.0
  %2108 = vmatpush1.msra.mxu0 %v1160
  %2109 = vmatprep.subr.mxu0 0.0
  %2110 = vmatpush1.msra.mxu0 %v1162
  %2111 = vmatprep.subr.mxu0 0.0
  %2112 = vmatpush1.msra.mxu0 %v1164
  %2113 = vmatprep.subr.mxu0 0.0
  %2114 = vmatpush1.msra.mxu0 %v1166
  %2115 = vmatprep.subr.mxu0 0.0
  %2116 = vmatpush1.msra.mxu0 %v1168
  %2117 = vmatprep.subr.mxu0 0.0
  %2118 = vmatpush1.msra.mxu0 %v1170
  %2119 = vmatprep.subr.mxu0 0.0
  %2120 = vmatpush1.msra.mxu0 %v1172
  %2121 = vmatprep.subr.mxu0 0.0
  %2122 = vmatpush1.msra.mxu0 %v1174
  %2123 = vmatprep.subr.mxu0 0.0
  %2124 = vmatpush1.msra.mxu0 %v1176
  %2125 = vmatprep.subr.mxu0 0.0
  %2126 = vmatpush1.msra.mxu0 %v1178
  %2127 = vmatprep.subr.mxu0 0.0
  %2128 = vmatpush1.msra.mxu0 %v1180
  %2129 = vmatprep.subr.mxu0 0.0
  %2130 = vmatpush1.msra.mxu0 %v1182
  %2131 = vmatprep.subr.mxu0 0.0
  %2132 = vmatpush1.msra.mxu0 %v1184
  %2133 = vmatprep.subr.mxu0 0.0
  %2134 = vmatpush1.msra.mxu0 %v1186
  %2135 = vmatprep.subr.mxu0 0.0
  %2136 = vmatpush1.msra.mxu0 %v1188
  %2137 = vmatprep.subr.mxu0 0.0
  %2138 = vmatpush1.msra.mxu0 %v1190
  %2139 = vmatprep.subr.mxu0 0.0
  %2140 = vmatpush1.msra.mxu0 %v1192
  %2141 = vmatprep.subr.mxu0 0.0
  %2142 = vmatpush1.msra.mxu0 %v1194
  %2143 = vmatprep.subr.mxu0 0.0
  %2144 = vmatpush1.msra.mxu0 %v1196
  %2145 = vmatprep.subr.mxu0 0.0
  %2146 = vmatpush1.msra.mxu0 %v1198
  %2147 = vmatprep.subr.mxu0 0.0
  %2148 = vmatpush1.msra.mxu0 %v1200
  %2149 = vmatprep.subr.mxu0 0.0
  %2150 = vmatpush1.msra.mxu0 %v1202
  %2151 = vmatprep.subr.mxu0 0.0
  %2152 = vmatpush1.msra.mxu0 %v1204
  %2153 = vmatprep.subr.mxu0 0.0
  %2154 = vmatpush1.msra.mxu0 %v1206
  %2155 = vmatprep.subr.mxu0 0.0
  %2156 = vmatpush1.msra.mxu0 %v1208
  %2157 = vmatprep.subr.mxu0 0.0
  %2158 = vmatpush1.msra.mxu0 %v1210
  %2159 = vmatprep.subr.mxu0 0.0
  %2160 = vmatpush1.msra.mxu0 %v1212
  %2161 = vmatprep.subr.mxu0 0.0
  %2162 = vmatpush1.msra.mxu0 %v1214
  %2163 = vmatprep.mubr.f32.mxu0 %v1696
  %2164 = vmatmul.mubr.f32.gmra.mrb[0].mxu0 %v1694
  %v2165 = vpop.f32.mrb[0].mxu0
  %v2166 = vadd.f32 %v2096, %v2165
  %v2167 = vpop.f32.mrb[0].mxu0
  %2168 = vdwg.mxu0
  %v2169 = vrcp.pop %v2166
  %v2170 = vmul.f32 %v2166, %v2169
  %v2171 = vsub.f32 2.0, %v2170
  %v2172 = vmul.f32 %v2169, %v2171
  %v2173 = vmul.f32 %v2026, %v2172
  %v2174 = vlaneseq
  %v2175 = vshrl.u32 %v2174, 7
  %v2176 = vsub.s32 0, %v2175
  %v2177 = vrot.slane %v2173, %v2176
  %v2178 = vlaneseq
  %v2179 = vshrl.u32 %v2178, 7
  %v2180 = vsub.s32 1, %v2179
  %v2181 = vrot.slane %v2173, %v2180
  %v2182 = vmul.f32 %v2177, %v353
  %v2183 = vmul.f32 %v2181, %v358
  %v2184 = vld [vmem:[%s4 + $0x1] sm:$0x1]
  %v2185 = vld [vmem:[%s4 + $0x2] sm:$0x1]
  %v2186 = vld [vmem:[%s4 + $0x3] sm:$0x1]
  %v2187 = vld [vmem:[%s4 + $0x18] sm:$0xff]
  %v2188 = vld [vmem:[%s4 + $0x20] sm:$0xff]
  %v2189 = vld [vmem:[%s4 + $0x28] sm:$0xff]
  %v2190 = vld [vmem:[%s4 + $0x30] sm:$0xff]
  %v2191 = vld [vmem:[%s4 + $0x38] sm:$0xff]
  %v2192 = vld [vmem:[%s4 + $0x40] sm:$0xff]
  %v2193 = vld [vmem:[%s4 + $0x48] sm:$0xff]
  %v2194 = vld [vmem:[%s4 + $0x50] sm:$0xff]
  %v2195 = vld [vmem:[%s4 + $0x58] sm:$0xff]
  %v2196 = vld [vmem:[%s4 + $0x60] sm:$0xff]
  %v2197 = vlaneseq
  %v2198 = vshrl.u32 %v2197, 7
  %v2199 = vsub.s32 0, %v2198
  %v2200 = vrot.slane %v2184, %v2199
  %v2202 = vsel %vm1343, %v2182, 0
  %v2205 = vsel %vm1343, %v2183, 0
  %2207 = vmatprep.subr.mxu0 0.0
  %2208 = vmatpush1.msra.mxu0 %v2187
  %2209 = vmatprep.subr.mxu0 0.0
  %2210 = vmatpush1.msra.mxu0 %v2188
  %2211 = vmatprep.subr.mxu0 0.0
  %2212 = vmatpush1.msra.mxu0 %v2189
  %2213 = vmatprep.subr.mxu0 0.0
  %2214 = vmatpush1.msra.mxu0 %v2190
  %2215 = vmatprep.subr.mxu0 0.0
  %2216 = vmatpush1.msra.mxu0 0.0
  %2217 = vmatprep.subr.mxu0 0.0
  %2218 = vmatpush1.msra.mxu0 0.0
  %2219 = vmatprep.subr.mxu0 0.0
  %2220 = vmatpush1.msra.mxu0 0.0
  %2221 = vmatprep.subr.mxu0 0.0
  %2222 = vmatpush1.msra.mxu0 0.0
  %2223 = vmatprep.subr.mxu0 0.0
  %2224 = vmatpush1.msra.mxu0 0.0
  %2225 = vmatprep.subr.mxu0 0.0
  %2226 = vmatpush1.msra.mxu0 0.0
  %2227 = vmatprep.subr.mxu0 0.0
  %2228 = vmatpush1.msra.mxu0 0.0
  %2229 = vmatprep.subr.mxu0 0.0
  %2230 = vmatpush1.msra.mxu0 0.0
  %2231 = vmatprep.subr.mxu0 0.0
  %2232 = vmatpush1.msra.mxu0 0.0
  %2233 = vmatprep.subr.mxu0 0.0
  %2234 = vmatpush1.msra.mxu0 0.0
  %2235 = vmatprep.subr.mxu0 0.0
  %2236 = vmatpush1.msra.mxu0 0.0
  %2237 = vmatprep.subr.mxu0 0.0
  %2238 = vmatpush1.msra.mxu0 0.0
  %2239 = vmatprep.subr.mxu0 0.0
  %2240 = vmatpush1.msra.mxu0 0.0
  %2241 = vmatprep.subr.mxu0 0.0
  %2242 = vmatpush1.msra.mxu0 0.0
  %2243 = vmatprep.subr.mxu0 0.0
  %2244 = vmatpush1.msra.mxu0 0.0
  %2245 = vmatprep.subr.mxu0 0.0
  %2246 = vmatpush1.msra.mxu0 0.0
  %2247 = vmatprep.subr.mxu0 0.0
  %2248 = vmatpush1.msra.mxu0 0.0
  %2249 = vmatprep.subr.mxu0 0.0
  %2250 = vmatpush1.msra.mxu0 0.0
  %2251 = vmatprep.subr.mxu0 0.0
  %2252 = vmatpush1.msra.mxu0 0.0
  %2253 = vmatprep.subr.mxu0 0.0
  %2254 = vmatpush1.msra.mxu0 0.0
  %2255 = vmatprep.subr.mxu0 0.0
  %2256 = vmatpush1.msra.mxu0 0.0
  %2257 = vmatprep.subr.mxu0 0.0
  %2258 = vmatpush1.msra.mxu0 0.0
  %2259 = vmatprep.subr.mxu0 0.0
  %2260 = vmatpush1.msra.mxu0 0.0
  %2261 = vmatprep.subr.mxu0 0.0
  %2262 = vmatpush1.msra.mxu0 0.0
  %2263 = vmatprep.subr.mxu0 0.0
  %2264 = vmatpush1.msra.mxu0 0.0
  %2265 = vmatprep.subr.mxu0 0.0
  %2266 = vmatpush1.msra.mxu0 0.0
  %2267 = vmatprep.subr.mxu0 0.0
  %2268 = vmatpush1.msra.mxu0 0.0
  %2269 = vmatprep.subr.mxu0 0.0
  %2270 = vmatpush1.msra.mxu0 0.0
  %2271 = vmatprep.mubr.f32.mxu0 0.0
  %2272 = vmatmul.mubr.f32.gmra.mrb[0].mxu0 %v2202
  %v2273 = vpop.f32.mrb[0].mxu0
  %v2274 = vadd.f32 %v2200, %v2273
  %v2275 = vpop.f32.mrb[0].mxu0
  %2276 = vmatprep.mubr.f32.mxu0 0.0
  %2277 = vmatmul.mubr.f32.gmra.mrb[0].mxu0 %v2205
  %v2278 = vpop.f32.mrb[0].mxu0
  %v2279 = vadd.f32 %v2200, %v2278
  %v2280 = vpop.f32.mrb[0].mxu0
  %2281 = vdwg.mxu0
  %v2282 = vmax.f32 %v2274, 0.0
  %v2283 = vmax.f32 %v2279, 0.0
  %v2284 = vlaneseq
  %v2285 = vshrl.u32 %v2284, 7
  %v2286 = vsub.s32 0, %v2285
  %v2287 = vrot.slane %v2185, %v2286
  %v2289 = vsel %vm1343, %v2282, 0
  %v2292 = vsel %vm1343, %v2283, 0
  %2294 = vmatprep.subr.mxu0 0.0
  %2295 = vmatpush1.msra.mxu0 %v2191
  %2296 = vmatprep.subr.mxu0 0.0
  %2297 = vmatpush1.msra.mxu0 %v2192
  %2298 = vmatprep.subr.mxu0 0.0
  %2299 = vmatpush1.msra.mxu0 %v2193
  %2300 = vmatprep.subr.mxu0 0.0
  %2301 = vmatpush1.msra.mxu0 %v2194
  %2302 = vmatprep.subr.mxu0 0.0
  %2303 = vmatpush1.msra.mxu0 0.0
  %2304 = vmatprep.subr.mxu0 0.0
  %2305 = vmatpush1.msra.mxu0 0.0
  %2306 = vmatprep.subr.mxu0 0.0
  %2307 = vmatpush1.msra.mxu0 0.0
  %2308 = vmatprep.subr.mxu0 0.0
  %2309 = vmatpush1.msra.mxu0 0.0
  %2310 = vmatprep.subr.mxu0 0.0
  %2311 = vmatpush1.msra.mxu0 0.0
  %2312 = vmatprep.subr.mxu0 0.0
  %2313 = vmatpush1.msra.mxu0 0.0
  %2314 = vmatprep.subr.mxu0 0.0
  %2315 = vmatpush1.msra.mxu0 0.0
  %2316 = vmatprep.subr.mxu0 0.0
  %2317 = vmatpush1.msra.mxu0 0.0
  %2318 = vmatprep.subr.mxu0 0.0
  %2319 = vmatpush1.msra.mxu0 0.0
  %2320 = vmatprep.subr.mxu0 0.0
  %2321 = vmatpush1.msra.mxu0 0.0
  %2322 = vmatprep.subr.mxu0 0.0
  %2323 = vmatpush1.msra.mxu0 0.0
  %2324 = vmatprep.subr.mxu0 0.0
  %2325 = vmatpush1.msra.mxu0 0.0
  %2326 = vmatprep.subr.mxu0 0.0
  %2327 = vmatpush1.msra.mxu0 0.0
  %2328 = vmatprep.subr.mxu0 0.0
  %2329 = vmatpush1.msra.mxu0 0.0
  %2330 = vmatprep.subr.mxu0 0.0
  %2331 = vmatpush1.msra.mxu0 0.0
  %2332 = vmatprep.subr.mxu0 0.0
  %2333 = vmatpush1.msra.mxu0 0.0
  %2334 = vmatprep.subr.mxu0 0.0
  %2335 = vmatpush1.msra.mxu0 0.0
  %2336 = vmatprep.subr.mxu0 0.0
  %2337 = vmatpush1.msra.mxu0 0.0
  %2338 = vmatprep.subr.mxu0 0.0
  %2339 = vmatpush1.msra.mxu0 0.0
  %2340 = vmatprep.subr.mxu0 0.0
  %2341 = vmatpush1.msra.mxu0 0.0
  %2342 = vmatprep.subr.mxu0 0.0
  %2343 = vmatpush1.msra.mxu0 0.0
  %2344 = vmatprep.subr.mxu0 0.0
  %2345 = vmatpush1.msra.mxu0 0.0
  %2346 = vmatprep.subr.mxu0 0.0
  %2347 = vmatpush1.msra.mxu0 0.0
  %2348 = vmatprep.subr.mxu0 0.0
  %2349 = vmatpush1.msra.mxu0 0.0
  %2350 = vmatprep.subr.mxu0 0.0
  %2351 = vmatpush1.msra.mxu0 0.0
  %2352 = vmatprep.subr.mxu0 0.0
  %2353 = vmatpush1.msra.mxu0 0.0
  %2354 = vmatprep.subr.mxu0 0.0
  %2355 = vmatpush1.msra.mxu0 0.0
  %2356 = vmatprep.subr.mxu0 0.0
  %2357 = vmatpush1.msra.mxu0 0.0
  %2358 = vmatprep.mubr.f32.mxu0 0.0
  %2359 = vmatmul.mubr.f32.gmra.mrb[0].mxu0 %v2289
  %v2360 = vpop.f32.mrb[0].mxu0
  %v2361 = vadd.f32 %v2287, %v2360
  %v2362 = vpop.f32.mrb[0].mxu0
  %2363 = vmatprep.mubr.f32.mxu0 0.0
  %2364 = vmatmul.mubr.f32.gmra.mrb[0].mxu0 %v2292
  %v2365 = vpop.f32.mrb[0].mxu0
  %v2366 = vadd.f32 %v2287, %v2365
  %v2367 = vpop.f32.mrb[0].mxu0
  %2368 = vdwg.mxu0
  %v2369 = vmax.f32 %v2361, 0.0
  %v2370 = vmax.f32 %v2366, 0.0
  %v2371 = vlaneseq
  %v2372 = vshrl.u32 %v2371, 7
  %v2373 = vsub.s32 0, %v2372
  %v2374 = vrot.slane %v2186, %v2373
  %v2376 = vsel %vm364, %v2369, 0
  %v2379 = vsel %vm364, %v2370, 0
  %2381 = vmatprep.subr.mxu0 0.0
  %2382 = vmatpush1.msra.mxu0 %v2195
  %2383 = vmatprep.subr.mxu0 0.0
  %2384 = vmatpush1.msra.mxu0 %v2196
  %2385 = vmatprep.subr.mxu0 0.0
  %2386 = vmatpush1.msra.mxu0 0.0
  %2387 = vmatprep.subr.mxu0 0.0
  %2388 = vmatpush1.msra.mxu0 0.0
  %2389 = vmatprep.subr.mxu0 0.0
  %2390 = vmatpush1.msra.mxu0 0.0
  %2391 = vmatprep.subr.mxu0 0.0
  %2392 = vmatpush1.msra.mxu0 0.0
  %2393 = vmatprep.subr.mxu0 0.0
  %2394 = vmatpush1.msra.mxu0 0.0
  %2395 = vmatprep.subr.mxu0 0.0
  %2396 = vmatpush1.msra.mxu0 0.0
  %2397 = vmatprep.subr.mxu0 0.0
  %2398 = vmatpush1.msra.mxu0 0.0
  %2399 = vmatprep.subr.mxu0 0.0
  %2400 = vmatpush1.msra.mxu0 0.0
  %2401 = vmatprep.subr.mxu0 0.0
  %2402 = vmatpush1.msra.mxu0 0.0
  %2403 = vmatprep.subr.mxu0 0.0
  %2404 = vmatpush1.msra.mxu0 0.0
  %2405 = vmatprep.subr.mxu0 0.0
  %2406 = vmatpush1.msra.mxu0 0.0
  %2407 = vmatprep.subr.mxu0 0.0
  %2408 = vmatpush1.msra.mxu0 0.0
  %2409 = vmatprep.subr.mxu0 0.0
  %2410 = vmatpush1.msra.mxu0 0.0
  %2411 = vmatprep.subr.mxu0 0.0
  %2412 = vmatpush1.msra.mxu0 0.0
  %2413 = vmatprep.subr.mxu0 0.0
  %2414 = vmatpush1.msra.mxu0 0.0
  %2415 = vmatprep.subr.mxu0 0.0
  %2416 = vmatpush1.msra.mxu0 0.0
  %2417 = vmatprep.subr.mxu0 0.0
  %2418 = vmatpush1.msra.mxu0 0.0
  %2419 = vmatprep.subr.mxu0 0.0
  %2420 = vmatpush1.msra.mxu0 0.0
  %2421 = vmatprep.subr.mxu0 0.0
  %2422 = vmatpush1.msra.mxu0 0.0
  %2423 = vmatprep.subr.mxu0 0.0
  %2424 = vmatpush1.msra.mxu0 0.0
  %2425 = vmatprep.subr.mxu0 0.0
  %2426 = vmatpush1.msra.mxu0 0.0
  %2427 = vmatprep.subr.mxu0 0.0
  %2428 = vmatpush1.msra.mxu0 0.0
  %2429 = vmatprep.subr.mxu0 0.0
  %2430 = vmatpush1.msra.mxu0 0.0
  %2431 = vmatprep.subr.mxu0 0.0
  %2432 = vmatpush1.msra.mxu0 0.0
  %2433 = vmatprep.subr.mxu0 0.0
  %2434 = vmatpush1.msra.mxu0 0.0
  %2435 = vmatprep.subr.mxu0 0.0
  %2436 = vmatpush1.msra.mxu0 0.0
  %2437 = vmatprep.subr.mxu0 0.0
  %2438 = vmatpush1.msra.mxu0 0.0
  %2439 = vmatprep.subr.mxu0 0.0
  %2440 = vmatpush1.msra.mxu0 0.0
  %2441 = vmatprep.subr.mxu0 0.0
  %2442 = vmatpush1.msra.mxu0 0.0
  %2443 = vmatprep.subr.mxu0 0.0
  %2444 = vmatpush1.msra.mxu0 0.0
  %2445 = vmatprep.mubr.f32.mxu0 0.0
  %2446 = vmatmul.mubr.f32.gmra.mrb[0].mxu0 %v2376
  %v2447 = vpop.f32.mrb[0].mxu0
  %v2448 = vadd.f32 %v2374, %v2447
  %v2449 = vpop.f32.mrb[0].mxu0
  %2450 = vmatprep.mubr.f32.mxu0 0.0
  %2451 = vmatmul.mubr.f32.gmra.mrb[0].mxu0 %v2379
  %v2452 = vpop.f32.mrb[0].mxu0
  %v2453 = vadd.f32 %v2374, %v2452
  %v2454 = vpop.f32.mrb[0].mxu0
  %2455 = vdwg.mxu0
  %v2456 = vld [vmem:[%s2] sm:$0xff]
  %v2457 = vld [vmem:[%s2 + $0x8] sm:$0xff]
  %v2458 = vmul.f32 %v2456, %v2456
  %v2459 = vmul.f32 %v2457, %v2457
  %2461 = vset.pattern.permute.xlu0 0
  %2462 = vperm.xlu0 %2461, %v2458
  %v2463 = vpop.permute.xlu0 %2462
  %2466 = vset.pattern.permute.xlu0 0
  %2467 = vperm.xlu0 %2466, %v2459
  %v2468 = vpop.permute.xlu0 %2467
  %v2470 = vmul.f32 %v2448, %v2463
  %v2471 = vmul.f32 %v2453, %v2468
  %2472 = vst [vmem:[%s6] sm:$0xff] %v2470
  %2473 = vst [vmem:[%s6 + $0x8] sm:$0xff] %v2471
  // Predicated region
  $region26: #{condition_network_forward.1} parent=0 // pred_check
    _
  $region27: #{condition_network_forward.1} parent=0 // pred_check_branch
    %2475 = sbr.rel (0) target = $region29
  $region28: #{condition_network_forward.1} parent=0 // pred_region
    _
  $region29: #{condition_network_forward.1} parent=0 // pred_fallthru
    _
  // Predicated region
  $region30: #{condition_network_forward.1} parent=0 // pred_check
    _
  $region31: #{condition_network_forward.1} parent=0 // pred_check_branch
    %2477 = sbr.rel (0) target = $region33
  $region32: #{condition_network_forward.1} parent=0 // pred_region
    _
  $region33: #{condition_network_forward.1} parent=0 // pred_fallthru
    _

</llo_original>
